<compile_context>
chip_gen: v5e
topology: v5e:2x2
jax: 0.10.0
libtpu: 0.0.40
codegen_flags: <defaults>
</compile_context>

<pallas_src>
import functools

import jax
import jax.numpy as jnp
from jax.experimental import pallas as pl
from jax.experimental.pallas import tpu as pltpu

D_MODEL = 192
D_FF = 2048
LN_EPS = 1e-5


def _round_up(x, m):
    return (x + m - 1) // m * m


def _ffn_kernel(x_ref, w1_ref, w2_ref, gamma_ref, beta_ref, o_ref):
    # x_ref: (tm, d_model) tile of tokens, f32 in VMEM.
    x_f32 = x_ref[...]

    # Linear1 (no bias) + ReLU: bf16 operands on the MXU, f32 accumulation.
    h = jnp.dot(
        x_f32.astype(jnp.bfloat16),
        w1_ref[...],
        preferred_element_type=jnp.float32,
    )
    h = jnp.maximum(h, 0.0)

    # Linear2 (no bias): bf16 operands, f32 accumulation.
    y = jnp.dot(
        h.astype(jnp.bfloat16),
        w2_ref[...],
        preferred_element_type=jnp.float32,
    )

    # Residual add in f32.
    z = y + x_f32

    # LayerNorm over last dim (biased variance, eps=1e-5), affine gamma/beta.
    mean = jnp.mean(z, axis=-1, keepdims=True)
    centered = z - mean
    var = jnp.mean(centered * centered, axis=-1, keepdims=True)
    norm = centered * jax.lax.rsqrt(var + LN_EPS)
    out = norm * gamma_ref[...] + beta_ref[...]

    o_ref[...] = out.astype(o_ref.dtype)


@functools.partial(jax.jit, static_argnames=("tm",))
def poswise_ffn(x, w1, w2, gamma, beta, *, tm=256):
    """x: (batch, seq, d_model) f32. w1: (d_model, d_ff), w2: (d_ff, d_model)."""
    b, s, d = x.shape
    assert d == D_MODEL
    tokens = b * s

    # Effective token tile: multiple of 8 (f32 sublane), shrunk for tiny inputs.
    tm_eff = min(tm, _round_up(tokens, 8))
    padded = _round_up(tokens, tm_eff)

    x2 = x.reshape(tokens, d).astype(jnp.float32)
    if padded != tokens:
        x2 = jnp.pad(x2, ((0, padded - tokens), (0, 0)))

    # bf16 weights: native MXU rate + half the HBM/VMEM weight footprint.
    w1_bf = w1.astype(jnp.bfloat16)
    w2_bf = w2.astype(jnp.bfloat16)
    gamma2 = gamma.reshape(1, d).astype(jnp.float32)
    beta2 = beta.reshape(1, d).astype(jnp.float32)

    flops = 4 * padded * D_MODEL * D_FF  # two matmuls, 2*M*K*N each
    bytes_accessed = (
        padded * D_MODEL * 4 * 2               # x in + out (f32)
        + 2 * D_MODEL * D_FF * 2               # bf16 weights
        + 2 * D_MODEL * 4                      # gamma/beta
    )

    out = pl.pallas_call(
        _ffn_kernel,
        out_shape=jax.ShapeDtypeStruct((padded, d), x.dtype),
        grid_spec=pltpu.PrefetchScalarGridSpec(
            num_scalar_prefetch=0,
            grid=(padded // tm_eff,),
            in_specs=[
                # token tile: double-buffered (default) — it changes per step.
                pl.BlockSpec((tm_eff, D_MODEL), lambda i: (i, 0)),
                # grid-invariant operands: single-buffered, stay resident.
                pl.BlockSpec((D_MODEL, D_FF), lambda i: (0, 0),
                             pipeline_mode=pl.Buffered(1)),
                pl.BlockSpec((D_FF, D_MODEL), lambda i: (0, 0),
                             pipeline_mode=pl.Buffered(1)),
                pl.BlockSpec((1, D_MODEL), lambda i: (0, 0),
                             pipeline_mode=pl.Buffered(1)),
                pl.BlockSpec((1, D_MODEL), lambda i: (0, 0),
                             pipeline_mode=pl.Buffered(1)),
            ],
            out_specs=pl.BlockSpec((tm_eff, D_MODEL), lambda i: (i, 0)),
        ),
        compiler_params=pltpu.CompilerParams(
            dimension_semantics=("parallel",),
            vmem_limit_bytes=48 * 1024 * 1024,
        ),
        cost_estimate=pl.CostEstimate(
            flops=flops,
            transcendentals=padded,          # one rsqrt per token row
            bytes_accessed=bytes_accessed,
        ),
    )(x2, w1_bf, w2_bf, gamma2, beta2)

    return out[:tokens].reshape(b, s, d)
    # TODO(synk): optionally pad d_model 192 -> 256 (zero weight columns +
    # masked LayerNorm stats) for fully lane-dense stores / full 256-wide MXU
    # fill on v6e/v7x; left out to keep the module's exact parameter layout.


def _reference(x, w1, w2, gamma, beta):
    h = jnp.maximum(x @ w1, 0.0)
    y = h @ w2
    z = y + x
    mean = jnp.mean(z, axis=-1, keepdims=True)
    var = jnp.mean((z - mean) ** 2, axis=-1, keepdims=True)
    return (z - mean) / jnp.sqrt(var + LN_EPS) * gamma + beta


if __name__ == "__main__":
    key = jax.random.PRNGKey(0)
    k_x, k_w1, k_w2 = jax.random.split(key, 3)

    batch, seq = 2, 8
    x = jax.random.normal(k_x, (batch, seq, D_MODEL), dtype=jnp.float32)

    # Deterministic synthetic parameters (shapes follow nn.Linear / nn.LayerNorm).
    # nn.Linear stores weight as (out, in) and computes x @ W.T; we store the
    # transposed (in, out) matrices directly for the kernel.
    bound1 = 1.0 / (D_MODEL ** 0.5)
    bound2 = 1.0 / (D_FF ** 0.5)
    w1 = jax.random.uniform(k_w1, (D_MODEL, D_FF), jnp.float32, -bound1, bound1)
    w2 = jax.random.uniform(k_w2, (D_FF, D_MODEL), jnp.float32, -bound2, bound2)
    gamma = jnp.ones((D_MODEL,), jnp.float32)   # LayerNorm weight init
    beta = jnp.zeros((D_MODEL,), jnp.float32)   # LayerNorm bias init

    out = poswise_ffn(x, w1, w2, gamma, beta)
    out = jax.block_until_ready(out)

    ref = _reference(x, w1, w2, gamma, beta)
    assert out.shape == (batch, seq, D_MODEL)
    # bf16 matmul operands (f32 accumulation) -> loosen tolerance vs f32 ref.
    assert jnp.allclose(out, ref, atol=2e-2, rtol=2e-2), float(
        jnp.max(jnp.abs(out - ref)))

    print("KERNEL_OK")
</pallas_src>

<mosaic_0001>
module attributes {stable_mosaic.version = 11 : i64} {
  func.func @_ffn_kernel(%arg0: i32, %arg1: memref<16x192xf32, #tpu.memory_space<vmem>>, %arg2: memref<192x2048xbf16, #tpu.memory_space<vmem>>, %arg3: memref<2048x192xbf16, #tpu.memory_space<vmem>>, %arg4: memref<1x192xf32, #tpu.memory_space<vmem>>, %arg5: memref<1x192xf32, #tpu.memory_space<vmem>>, %arg6: memref<16x192xf32, #tpu.memory_space<vmem>>) attributes {dimension_semantics = [#tpu.dimension_semantics<parallel>], iteration_bounds = array<i64: 1>, scalar_prefetch = 0 : i64, scratch_operands = 0 : i64, tpu.core_type = #tpu.core_type<tc>, window_params = [{transform_indices = @transform_0, window_bounds = array<i64: 16, 192>}, {pipeline_mode = #tpu.pipeline_mode<synchronous>, transform_indices = @transform_1, window_bounds = array<i64: 192, 2048>}, {pipeline_mode = #tpu.pipeline_mode<synchronous>, transform_indices = @transform_2, window_bounds = array<i64: 2048, 192>}, {pipeline_mode = #tpu.pipeline_mode<synchronous>, transform_indices = @transform_3, window_bounds = array<i64: 1, 192>}, {pipeline_mode = #tpu.pipeline_mode<synchronous>, transform_indices = @transform_4, window_bounds = array<i64: 1, 192>}, {transform_indices = @transform_5, window_bounds = array<i64: 16, 192>}]} {
    %c0 = arith.constant 0 : index
    %c0_0 = arith.constant 0 : index
    %0 = vector.load %arg1[%c0, %c0_0] : memref<16x192xf32, #tpu.memory_space<vmem>>, vector<16x192xf32>
    %1 = arith.truncf %0 : vector<16x192xf32> to vector<16x192xbf16>
    %c0_1 = arith.constant 0 : index
    %c0_2 = arith.constant 0 : index
    %2 = vector.load %arg2[%c0_1, %c0_2] : memref<192x2048xbf16, #tpu.memory_space<vmem>>, vector<192x2048xbf16>
    %cst = arith.constant dense<0.000000e+00> : vector<16x2048xf32>
    %3 = tpu.matmul %1, %2, %cst {dimension_numbers = #tpu.dot_dimension_numbers<[1], [0], [0], [1], [0, 0, 1, 1], [], []>} : vector<16x192xbf16>, vector<192x2048xbf16>, vector<16x2048xf32> -> vector<16x2048xf32>
    %cst_3 = arith.constant 0.000000e+00 : f32
    %4 = vector.broadcast %cst_3 : f32 to vector<16x2048xf32>
    %5 = arith.maximumf %3, %4 : vector<16x2048xf32>
    %6 = arith.truncf %5 : vector<16x2048xf32> to vector<16x2048xbf16>
    %c0_4 = arith.constant 0 : index
    %c0_5 = arith.constant 0 : index
    %7 = vector.load %arg3[%c0_4, %c0_5] : memref<2048x192xbf16, #tpu.memory_space<vmem>>, vector<2048x192xbf16>
    %cst_6 = arith.constant dense<0.000000e+00> : vector<16x192xf32>
    %8 = tpu.matmul %6, %7, %cst_6 {dimension_numbers = #tpu.dot_dimension_numbers<[1], [0], [0], [1], [0, 0, 1, 1], [], []>} : vector<16x2048xbf16>, vector<2048x192xbf16>, vector<16x192xf32> -> vector<16x192xf32>
    %9 = arith.addf %8, %0 : vector<16x192xf32>
    %cst_7 = arith.constant dense<0.000000e+00> : vector<16xf32>
    %10 = vector.multi_reduction <add>, %9, %cst_7 [1] : vector<16x192xf32> to vector<16xf32>
    %11 = vector.shape_cast %10 : vector<16xf32> to vector<16x1xf32>
    %cst_8 = arith.constant 1.920000e+02 : f32
    %12 = vector.broadcast %cst_8 : f32 to vector<16x1xf32>
    %13 = arith.divf %11, %12 : vector<16x1xf32>
    %14 = vector.broadcast %13 : vector<16x1xf32> to vector<16x192xf32>
    %15 = arith.subf %9, %14 : vector<16x192xf32>
    %16 = arith.mulf %15, %15 : vector<16x192xf32>
    %cst_9 = arith.constant dense<0.000000e+00> : vector<16xf32>
    %17 = vector.multi_reduction <add>, %16, %cst_9 [1] : vector<16x192xf32> to vector<16xf32>
    %18 = vector.shape_cast %17 : vector<16xf32> to vector<16x1xf32>
    %cst_10 = arith.constant 1.920000e+02 : f32
    %19 = vector.broadcast %cst_10 : f32 to vector<16x1xf32>
    %20 = arith.divf %18, %19 : vector<16x1xf32>
    %cst_11 = arith.constant 9.99999974E-6 : f32
    %21 = vector.broadcast %cst_11 : f32 to vector<16x1xf32>
    %22 = arith.addf %20, %21 : vector<16x1xf32>
    %23 = math.rsqrt %22 : vector<16x1xf32>
    %24 = vector.broadcast %23 : vector<16x1xf32> to vector<16x192xf32>
    %25 = arith.mulf %15, %24 : vector<16x192xf32>
    %c0_12 = arith.constant 0 : index
    %c0_13 = arith.constant 0 : index
    %26 = vector.load %arg4[%c0_12, %c0_13] : memref<1x192xf32, #tpu.memory_space<vmem>>, vector<1x192xf32>
    %27 = vector.broadcast %26 : vector<1x192xf32> to vector<16x192xf32>
    %28 = arith.mulf %25, %27 : vector<16x192xf32>
    %c0_14 = arith.constant 0 : index
    %c0_15 = arith.constant 0 : index
    %29 = vector.load %arg5[%c0_14, %c0_15] : memref<1x192xf32, #tpu.memory_space<vmem>>, vector<1x192xf32>
    %30 = vector.broadcast %29 : vector<1x192xf32> to vector<16x192xf32>
    %31 = arith.addf %28, %30 : vector<16x192xf32>
    %c0_16 = arith.constant 0 : index
    %c0_17 = arith.constant 0 : index
    %32 = vector.load %arg6[%c0_16, %c0_17] : memref<16x192xf32, #tpu.memory_space<vmem>>, vector<16x192xf32>
    tpu.vector_store %arg6[%c0_16, %c0_17], %31 {strides = array<i32>} : memref<16x192xf32, #tpu.memory_space<vmem>>, vector<16x192xf32>,
    return
  }
  func.func @transform_0(%arg0: i32) -> (i32, i32) {
    %c0_i32 = arith.constant 0 : i32
    %c0_i32_0 = arith.constant 0 : i32
    return %arg0, %c0_i32 : i32, i32
  }
  func.func @transform_1(%arg0: i32) -> (i32, i32) {
    %c0_i32 = arith.constant 0 : i32
    %c0_i32_0 = arith.constant 0 : i32
    %c0_i32_1 = arith.constant 0 : i32
    return %c0_i32, %c0_i32_0 : i32, i32
  }
  func.func @transform_2(%arg0: i32) -> (i32, i32) {
    %c0_i32 = arith.constant 0 : i32
    %c0_i32_0 = arith.constant 0 : i32
    %c0_i32_1 = arith.constant 0 : i32
    return %c0_i32, %c0_i32_0 : i32, i32
  }
  func.func @transform_3(%arg0: i32) -> (i32, i32) {
    %c0_i32 = arith.constant 0 : i32
    %c0_i32_0 = arith.constant 0 : i32
    %c0_i32_1 = arith.constant 0 : i32
    return %c0_i32, %c0_i32_0 : i32, i32
  }
  func.func @transform_4(%arg0: i32) -> (i32, i32) {
    %c0_i32 = arith.constant 0 : i32
    %c0_i32_0 = arith.constant 0 : i32
    %c0_i32_1 = arith.constant 0 : i32
    return %c0_i32, %c0_i32_0 : i32, i32
  }
  func.func @transform_5(%arg0: i32) -> (i32, i32) {
    %c0_i32 = arith.constant 0 : i32
    %c0_i32_0 = arith.constant 0 : i32
    return %arg0, %c0_i32 : i32, i32
  }
}

</mosaic_0001>

<llo_original>
// kernel: poswise_ffn.1
$region0: #{poswise_ffn.1}
  #allocation0 [shape = 'u32[]', space=smem, size = 0x4, offset = 0x4, fixed_abs, tag = 'smem constant byte address 0x4 - core index']
  #allocation1 [shape = 'u32[72,128]{1,0:T(1,128)}', space=vmem, size = 0x9000, scoped, tag = 'internal scratch']
  %s0 = inlined_call_operand.vmem [shape: f32[16,192], index: 0, kind: input, shape index: {}]
  %s1 = inlined_call_operand.vmem [shape: bf16[192,2048], index: 1, kind: input, shape index: {}]
  %s2 = inlined_call_operand.vmem [shape: bf16[2048,192], index: 2, kind: input, shape index: {}]
  %s3 = inlined_call_operand.vmem [shape: f32[1,192], index: 3, kind: input, shape index: {}]
  %s4 = inlined_call_operand.vmem [shape: f32[1,192], index: 4, kind: input, shape index: {}]
  %s5 = inlined_call_operand.hbm [shape: f32[16,192], index: 5, kind: output, shape index: {}]
  %s6 = sld [smem:[#allocation0]]
  $region30: #{poswise_ffn.1} parent=0
    _
  %s8 = ssub.s32 1, %s6
  %s9 = scalar_select 0, %s8, %s6
  $region1: #{poswise_ffn.1} parent=0
    #allocation2 [shape = 'u8[16384]{0}', space=vmem, size = 0x4000, scoped, tag = 'output window, operand 0, single buffered']
    #allocation3 [shape = 's32[1]{0}', space=sflag, size = 0x4, scoped, tag = 'scoped memory for poswise_ffn.1']
    %10 = vsyncpa [#allocation3], 0
    // Predicated region
    $region2: #{poswise_ffn.1} parent=1 // pred_check
      _
    $region3: #{poswise_ffn.1} parent=1 // pred_check_branch
      %12 = sbr.rel (0) target = $region5
    $region4: #{poswise_ffn.1} parent=1 // pred_region
      _
    $region5: #{poswise_ffn.1} parent=1 // pred_fallthru
      _
    // Predicated region
    $region6: #{poswise_ffn.1} parent=1 // pred_check
      _
    $region7: #{poswise_ffn.1} parent=1 // pred_check_branch
      %14 = sbr.rel (0) target = $region9
    $region8: #{poswise_ffn.1} parent=1 // pred_region
      _
    $region9: #{poswise_ffn.1} parent=1 // pred_fallthru
      _
    // Predicated region
    $region10: #{poswise_ffn.1} parent=1 // pred_check
      _
    $region11: #{poswise_ffn.1} parent=1 // pred_check_branch
      %16 = sbr.rel (0) target = $region13
    $region12: #{poswise_ffn.1} parent=1 // pred_region
      _
    $region13: #{poswise_ffn.1} parent=1 // pred_fallthru
      _
    // Predicated region
    $region14: #{poswise_ffn.1} parent=1 // pred_check
      _
    $region15: #{poswise_ffn.1} parent=1 // pred_check_branch
      %18 = sbr.rel (0) target = $region17
    $region16: #{poswise_ffn.1} parent=1 // pred_region
      _
    $region17: #{poswise_ffn.1} parent=1 // pred_fallthru
      _
    // Predicated region
    $region18: #{poswise_ffn.1} parent=1 // pred_check
      _
    $region19: #{poswise_ffn.1} parent=1 // pred_check_branch
      %20 = sbr.rel (0) target = $region21
    $region20: #{poswise_ffn.1} parent=1 // pred_region
      _
    $region21: #{poswise_ffn.1} parent=1 // pred_fallthru
      _
    %v22 = vld [vmem:[%s0] sm:$0xff]
    %v23 = vld [vmem:[%s0 + $0x8] sm:$0xff]
    %v24 = vld [vmem:[%s0 + $0x10] sm:$0xff]
    %v25 = vld [vmem:[%s0 + $0x18] sm:$0xff]
    %v26 = vpack.c.bf16 %v24, %v22
    %v27 = vpack.c.bf16 %v25, %v23
    %v28 = vld [vmem:[%s1] sm:$0xff]
    %v29 = vld [vmem:[%s1 + $0x8] sm:$0xff]
    %v30 = vld [vmem:[%s1 + $0x10] sm:$0xff]
    %v31 = vld [vmem:[%s1 + $0x18] sm:$0xff]
    %v32 = vld [vmem:[%s1 + $0x20] sm:$0xff]
    %v33 = vld [vmem:[%s1 + $0x28] sm:$0xff]
    %v34 = vld [vmem:[%s1 + $0x30] sm:$0xff]
    %v35 = vld [vmem:[%s1 + $0x38] sm:$0xff]
    %v36 = vld [vmem:[%s1 + $0x40] sm:$0xff]
    %v37 = vld [vmem:[%s1 + $0x48] sm:$0xff]
    %v38 = vld [vmem:[%s1 + $0x50] sm:$0xff]
    %v39 = vld [vmem:[%s1 + $0x58] sm:$0xff]
    %v40 = vld [vmem:[%s1 + $0x60] sm:$0xff]
    %v41 = vld [vmem:[%s1 + $0x68] sm:$0xff]
    %v42 = vld [vmem:[%s1 + $0x70] sm:$0xff]
    %v43 = vld [vmem:[%s1 + $0x78] sm:$0xff]
    %v44 = vld [vmem:[%s1 + $0x80] sm:$0xff]
    %v45 = vld [vmem:[%s1 + $0x88] sm:$0xff]
    %v46 = vld [vmem:[%s1 + $0x90] sm:$0xff]
    %v47 = vld [vmem:[%s1 + $0x98] sm:$0xff]
    %v48 = vld [vmem:[%s1 + $0xa0] sm:$0xff]
    %v49 = vld [vmem:[%s1 + $0xa8] sm:$0xff]
    %v50 = vld [vmem:[%s1 + $0xb0] sm:$0xff]
    %v51 = vld [vmem:[%s1 + $0xb8] sm:$0xff]
    %v52 = vld [vmem:[%s1 + $0xc0] sm:$0xff]
    %v53 = vld [vmem:[%s1 + $0xc8] sm:$0xff]
    %v54 = vld [vmem:[%s1 + $0xd0] sm:$0xff]
    %v55 = vld [vmem:[%s1 + $0xd8] sm:$0xff]
    %v56 = vld [vmem:[%s1 + $0xe0] sm:$0xff]
    %v57 = vld [vmem:[%s1 + $0xe8] sm:$0xff]
    %v58 = vld [vmem:[%s1 + $0xf0] sm:$0xff]
    %v59 = vld [vmem:[%s1 + $0xf8] sm:$0xff]
    %v60 = vld [vmem:[%s1 + $0x100] sm:$0xff]
    %v61 = vld [vmem:[%s1 + $0x108] sm:$0xff]
    %v62 = vld [vmem:[%s1 + $0x110] sm:$0xff]
    %v63 = vld [vmem:[%s1 + $0x118] sm:$0xff]
    %v64 = vld [vmem:[%s1 + $0x120] sm:$0xff]
    %v65 = vld [vmem:[%s1 + $0x128] sm:$0xff]
    %v66 = vld [vmem:[%s1 + $0x130] sm:$0xff]
    %v67 = vld [vmem:[%s1 + $0x138] sm:$0xff]
    %v68 = vld [vmem:[%s1 + $0x140] sm:$0xff]
    %v69 = vld [vmem:[%s1 + $0x148] sm:$0xff]
    %v70 = vld [vmem:[%s1 + $0x150] sm:$0xff]
    %v71 = vld [vmem:[%s1 + $0x158] sm:$0xff]
    %v72 = vld [vmem:[%s1 + $0x160] sm:$0xff]
    %v73 = vld [vmem:[%s1 + $0x168] sm:$0xff]
    %v74 = vld [vmem:[%s1 + $0x170] sm:$0xff]
    %v75 = vld [vmem:[%s1 + $0x178] sm:$0xff]
    %v76 = vld [vmem:[%s1 + $0x180] sm:$0xff]
    %v77 = vld [vmem:[%s1 + $0x188] sm:$0xff]
    %v78 = vld [vmem:[%s1 + $0x190] sm:$0xff]
    %v79 = vld [vmem:[%s1 + $0x198] sm:$0xff]
    %v80 = vld [vmem:[%s1 + $0x1a0] sm:$0xff]
    %v81 = vld [vmem:[%s1 + $0x1a8] sm:$0xff]
    %v82 = vld [vmem:[%s1 + $0x1b0] sm:$0xff]
    %v83 = vld [vmem:[%s1 + $0x1b8] sm:$0xff]
    %v84 = vld [vmem:[%s1 + $0x1c0] sm:$0xff]
    %v85 = vld [vmem:[%s1 + $0x1c8] sm:$0xff]
    %v86 = vld [vmem:[%s1 + $0x1d0] sm:$0xff]
    %v87 = vld [vmem:[%s1 + $0x1d8] sm:$0xff]
    %v88 = vld [vmem:[%s1 + $0x1e0] sm:$0xff]
    %v89 = vld [vmem:[%s1 + $0x1e8] sm:$0xff]
    %v90 = vld [vmem:[%s1 + $0x1f0] sm:$0xff]
    %v91 = vld [vmem:[%s1 + $0x1f8] sm:$0xff]
    %v92 = vld [vmem:[%s1 + $0x200] sm:$0xff]
    %v93 = vld [vmem:[%s1 + $0x208] sm:$0xff]
    %v94 = vld [vmem:[%s1 + $0x210] sm:$0xff]
    %v95 = vld [vmem:[%s1 + $0x218] sm:$0xff]
    %v96 = vld [vmem:[%s1 + $0x220] sm:$0xff]
    %v97 = vld [vmem:[%s1 + $0x228] sm:$0xff]
    %v98 = vld [vmem:[%s1 + $0x230] sm:$0xff]
    %v99 = vld [vmem:[%s1 + $0x238] sm:$0xff]
    %v100 = vld [vmem:[%s1 + $0x240] sm:$0xff]
    %v101 = vld [vmem:[%s1 + $0x248] sm:$0xff]
    %v102 = vld [vmem:[%s1 + $0x250] sm:$0xff]
    %v103 = vld [vmem:[%s1 + $0x258] sm:$0xff]
    %v104 = vld [vmem:[%s1 + $0x260] sm:$0xff]
    %v105 = vld [vmem:[%s1 + $0x268] sm:$0xff]
    %v106 = vld [vmem:[%s1 + $0x270] sm:$0xff]
    %v107 = vld [vmem:[%s1 + $0x278] sm:$0xff]
    %v108 = vld [vmem:[%s1 + $0x280] sm:$0xff]
    %v109 = vld [vmem:[%s1 + $0x288] sm:$0xff]
    %v110 = vld [vmem:[%s1 + $0x290] sm:$0xff]
    %v111 = vld [vmem:[%s1 + $0x298] sm:$0xff]
    %v112 = vld [vmem:[%s1 + $0x2a0] sm:$0xff]
    %v113 = vld [vmem:[%s1 + $0x2a8] sm:$0xff]
    %v114 = vld [vmem:[%s1 + $0x2b0] sm:$0xff]
    %v115 = vld [vmem:[%s1 + $0x2b8] sm:$0xff]
    %v116 = vld [vmem:[%s1 + $0x2c0] sm:$0xff]
    %v117 = vld [vmem:[%s1 + $0x2c8] sm:$0xff]
    %v118 = vld [vmem:[%s1 + $0x2d0] sm:$0xff]
    %v119 = vld [vmem:[%s1 + $0x2d8] sm:$0xff]
    %v120 = vld [vmem:[%s1 + $0x2e0] sm:$0xff]
    %v121 = vld [vmem:[%s1 + $0x2e8] sm:$0xff]
    %v122 = vld [vmem:[%s1 + $0x2f0] sm:$0xff]
    %v123 = vld [vmem:[%s1 + $0x2f8] sm:$0xff]
    %v124 = vld [vmem:[%s1 + $0x300] sm:$0xff]
    %v125 = vld [vmem:[%s1 + $0x308] sm:$0xff]
    %v126 = vld [vmem:[%s1 + $0x310] sm:$0xff]
    %v127 = vld [vmem:[%s1 + $0x318] sm:$0xff]
    %v128 = vld [vmem:[%s1 + $0x320] sm:$0xff]
    %v129 = vld [vmem:[%s1 + $0x328] sm:$0xff]
    %v130 = vld [vmem:[%s1 + $0x330] sm:$0xff]
    %v131 = vld [vmem:[%s1 + $0x338] sm:$0xff]
    %v132 = vld [vmem:[%s1 + $0x340] sm:$0xff]
    %v133 = vld [vmem:[%s1 + $0x348] sm:$0xff]
    %v134 = vld [vmem:[%s1 + $0x350] sm:$0xff]
    %v135 = vld [vmem:[%s1 + $0x358] sm:$0xff]
    %v136 = vld [vmem:[%s1 + $0x360] sm:$0xff]
    %v137 = vld [vmem:[%s1 + $0x368] sm:$0xff]
    %v138 = vld [vmem:[%s1 + $0x370] sm:$0xff]
    %v139 = vld [vmem:[%s1 + $0x378] sm:$0xff]
    %v140 = vld [vmem:[%s1 + $0x380] sm:$0xff]
    %v141 = vld [vmem:[%s1 + $0x388] sm:$0xff]
    %v142 = vld [vmem:[%s1 + $0x390] sm:$0xff]
    %v143 = vld [vmem:[%s1 + $0x398] sm:$0xff]
    %v144 = vld [vmem:[%s1 + $0x3a0] sm:$0xff]
    %v145 = vld [vmem:[%s1 + $0x3a8] sm:$0xff]
    %v146 = vld [vmem:[%s1 + $0x3b0] sm:$0xff]
    %v147 = vld [vmem:[%s1 + $0x3b8] sm:$0xff]
    %v148 = vld [vmem:[%s1 + $0x3c0] sm:$0xff]
    %v149 = vld [vmem:[%s1 + $0x3c8] sm:$0xff]
    %v150 = vld [vmem:[%s1 + $0x3d0] sm:$0xff]
    %v151 = vld [vmem:[%s1 + $0x3d8] sm:$0xff]
    %v152 = vld [vmem:[%s1 + $0x3e0] sm:$0xff]
    %v153 = vld [vmem:[%s1 + $0x3e8] sm:$0xff]
    %v154 = vld [vmem:[%s1 + $0x3f0] sm:$0xff]
    %v155 = vld [vmem:[%s1 + $0x3f8] sm:$0xff]
    %v156 = vld [vmem:[%s1 + $0x400] sm:$0xff]
    %v157 = vld [vmem:[%s1 + $0x408] sm:$0xff]
    %v158 = vld [vmem:[%s1 + $0x410] sm:$0xff]
    %v159 = vld [vmem:[%s1 + $0x418] sm:$0xff]
    %v160 = vld [vmem:[%s1 + $0x420] sm:$0xff]
    %v161 = vld [vmem:[%s1 + $0x428] sm:$0xff]
    %v162 = vld [vmem:[%s1 + $0x430] sm:$0xff]
    %v163 = vld [vmem:[%s1 + $0x438] sm:$0xff]
    %v164 = vld [vmem:[%s1 + $0x440] sm:$0xff]
    %v165 = vld [vmem:[%s1 + $0x448] sm:$0xff]
    %v166 = vld [vmem:[%s1 + $0x450] sm:$0xff]
    %v167 = vld [vmem:[%s1 + $0x458] sm:$0xff]
    %v168 = vld [vmem:[%s1 + $0x460] sm:$0xff]
    %v169 = vld [vmem:[%s1 + $0x468] sm:$0xff]
    %v170 = vld [vmem:[%s1 + $0x470] sm:$0xff]
    %v171 = vld [vmem:[%s1 + $0x478] sm:$0xff]
    %v172 = vld [vmem:[%s1 + $0x480] sm:$0xff]
    %v173 = vld [vmem:[%s1 + $0x488] sm:$0xff]
    %v174 = vld [vmem:[%s1 + $0x490] sm:$0xff]
    %v175 = vld [vmem:[%s1 + $0x498] sm:$0xff]
    %v176 = vld [vmem:[%s1 + $0x4a0] sm:$0xff]
    %v177 = vld [vmem:[%s1 + $0x4a8] sm:$0xff]
    %v178 = vld [vmem:[%s1 + $0x4b0] sm:$0xff]
    %v179 = vld [vmem:[%s1 + $0x4b8] sm:$0xff]
    %v180 = vld [vmem:[%s1 + $0x4c0] sm:$0xff]
    %v181 = vld [vmem:[%s1 + $0x4c8] sm:$0xff]
    %v182 = vld [vmem:[%s1 + $0x4d0] sm:$0xff]
    %v183 = vld [vmem:[%s1 + $0x4d8] sm:$0xff]
    %v184 = vld [vmem:[%s1 + $0x4e0] sm:$0xff]
    %v185 = vld [vmem:[%s1 + $0x4e8] sm:$0xff]
    %v186 = vld [vmem:[%s1 + $0x4f0] sm:$0xff]
    %v187 = vld [vmem:[%s1 + $0x4f8] sm:$0xff]
    %v188 = vld [vmem:[%s1 + $0x500] sm:$0xff]
    %v189 = vld [vmem:[%s1 + $0x508] sm:$0xff]
    %v190 = vld [vmem:[%s1 + $0x510] sm:$0xff]
    %v191 = vld [vmem:[%s1 + $0x518] sm:$0xff]
    %v192 = vld [vmem:[%s1 + $0x520] sm:$0xff]
    %v193 = vld [vmem:[%s1 + $0x528] sm:$0xff]
    %v194 = vld [vmem:[%s1 + $0x530] sm:$0xff]
    %v195 = vld [vmem:[%s1 + $0x538] sm:$0xff]
    %v196 = vld [vmem:[%s1 + $0x540] sm:$0xff]
    %v197 = vld [vmem:[%s1 + $0x548] sm:$0xff]
    %v198 = vld [vmem:[%s1 + $0x550] sm:$0xff]
    %v199 = vld [vmem:[%s1 + $0x558] sm:$0xff]
    %v200 = vld [vmem:[%s1 + $0x560] sm:$0xff]
    %v201 = vld [vmem:[%s1 + $0x568] sm:$0xff]
    %v202 = vld [vmem:[%s1 + $0x570] sm:$0xff]
    %v203 = vld [vmem:[%s1 + $0x578] sm:$0xff]
    %v204 = vld [vmem:[%s1 + $0x580] sm:$0xff]
    %v205 = vld [vmem:[%s1 + $0x588] sm:$0xff]
    %v206 = vld [vmem:[%s1 + $0x590] sm:$0xff]
    %v207 = vld [vmem:[%s1 + $0x598] sm:$0xff]
    %v208 = vld [vmem:[%s1 + $0x5a0] sm:$0xff]
    %v209 = vld [vmem:[%s1 + $0x5a8] sm:$0xff]
    %v210 = vld [vmem:[%s1 + $0x5b0] sm:$0xff]
    %v211 = vld [vmem:[%s1 + $0x5b8] sm:$0xff]
    %v212 = vld [vmem:[%s1 + $0x5c0] sm:$0xff]
    %v213 = vld [vmem:[%s1 + $0x5c8] sm:$0xff]
    %v214 = vld [vmem:[%s1 + $0x5d0] sm:$0xff]
    %v215 = vld [vmem:[%s1 + $0x5d8] sm:$0xff]
    %v216 = vld [vmem:[%s1 + $0x5e0] sm:$0xff]
    %v217 = vld [vmem:[%s1 + $0x5e8] sm:$0xff]
    %v218 = vld [vmem:[%s1 + $0x5f0] sm:$0xff]
    %v219 = vld [vmem:[%s1 + $0x5f8] sm:$0xff]
    %v412 = vunpack.c.l.b16 %v28
    %v413 = vunpack.c.h.b16 %v28
    %v414 = vunpack.c.l.b16 %v29
    %v415 = vunpack.c.h.b16 %v29
    %v416 = vunpack.c.l.b16 %v30
    %v417 = vunpack.c.h.b16 %v30
    %v418 = vunpack.c.l.b16 %v31
    %v419 = vunpack.c.h.b16 %v31
    %v420 = vunpack.c.l.b16 %v32
    %v421 = vunpack.c.h.b16 %v32
    %v422 = vunpack.c.l.b16 %v33
    %v423 = vunpack.c.h.b16 %v33
    %v424 = vunpack.c.l.b16 %v34
    %v425 = vunpack.c.h.b16 %v34
    %v426 = vunpack.c.l.b16 %v35
    %v427 = vunpack.c.h.b16 %v35
    %v428 = vunpack.c.l.b16 %v36
    %v429 = vunpack.c.h.b16 %v36
    %v430 = vunpack.c.l.b16 %v37
    %v431 = vunpack.c.h.b16 %v37
    %v432 = vunpack.c.l.b16 %v38
    %v433 = vunpack.c.h.b16 %v38
    %v434 = vunpack.c.l.b16 %v39
    %v435 = vunpack.c.h.b16 %v39
    %v436 = vunpack.c.l.b16 %v40
    %v437 = vunpack.c.h.b16 %v40
    %v438 = vunpack.c.l.b16 %v41
    %v439 = vunpack.c.h.b16 %v41
    %v440 = vunpack.c.l.b16 %v42
    %v441 = vunpack.c.h.b16 %v42
    %v442 = vunpack.c.l.b16 %v43
    %v443 = vunpack.c.h.b16 %v43
    %v444 = vunpack.c.l.b16 %v44
    %v445 = vunpack.c.h.b16 %v44
    %v446 = vunpack.c.l.b16 %v45
    %v447 = vunpack.c.h.b16 %v45
    %v448 = vunpack.c.l.b16 %v46
    %v449 = vunpack.c.h.b16 %v46
    %v450 = vunpack.c.l.b16 %v47
    %v451 = vunpack.c.h.b16 %v47
    %v452 = vunpack.c.l.b16 %v48
    %v453 = vunpack.c.h.b16 %v48
    %v454 = vunpack.c.l.b16 %v49
    %v455 = vunpack.c.h.b16 %v49
    %v456 = vunpack.c.l.b16 %v50
    %v457 = vunpack.c.h.b16 %v50
    %v458 = vunpack.c.l.b16 %v51
    %v459 = vunpack.c.h.b16 %v51
    %v460 = vunpack.c.l.b16 %v52
    %v461 = vunpack.c.h.b16 %v52
    %v462 = vunpack.c.l.b16 %v53
    %v463 = vunpack.c.h.b16 %v53
    %v464 = vunpack.c.l.b16 %v54
    %v465 = vunpack.c.h.b16 %v54
    %v466 = vunpack.c.l.b16 %v55
    %v467 = vunpack.c.h.b16 %v55
    %v468 = vunpack.c.l.b16 %v56
    %v469 = vunpack.c.h.b16 %v56
    %v470 = vunpack.c.l.b16 %v57
    %v471 = vunpack.c.h.b16 %v57
    %v472 = vunpack.c.l.b16 %v58
    %v473 = vunpack.c.h.b16 %v58
    %v474 = vunpack.c.l.b16 %v59
    %v475 = vunpack.c.h.b16 %v59
    %v476 = vunpack.c.l.b16 %v60
    %v477 = vunpack.c.h.b16 %v60
    %v478 = vunpack.c.l.b16 %v61
    %v479 = vunpack.c.h.b16 %v61
    %v480 = vunpack.c.l.b16 %v62
    %v481 = vunpack.c.h.b16 %v62
    %v482 = vunpack.c.l.b16 %v63
    %v483 = vunpack.c.h.b16 %v63
    %v484 = vunpack.c.l.b16 %v64
    %v485 = vunpack.c.h.b16 %v64
    %v486 = vunpack.c.l.b16 %v65
    %v487 = vunpack.c.h.b16 %v65
    %v488 = vunpack.c.l.b16 %v66
    %v489 = vunpack.c.h.b16 %v66
    %v490 = vunpack.c.l.b16 %v67
    %v491 = vunpack.c.h.b16 %v67
    %v492 = vunpack.c.l.b16 %v68
    %v493 = vunpack.c.h.b16 %v68
    %v494 = vunpack.c.l.b16 %v69
    %v495 = vunpack.c.h.b16 %v69
    %v496 = vunpack.c.l.b16 %v70
    %v497 = vunpack.c.h.b16 %v70
    %v498 = vunpack.c.l.b16 %v71
    %v499 = vunpack.c.h.b16 %v71
    %v500 = vunpack.c.l.b16 %v72
    %v501 = vunpack.c.h.b16 %v72
    %v502 = vunpack.c.l.b16 %v73
    %v503 = vunpack.c.h.b16 %v73
    %v504 = vunpack.c.l.b16 %v74
    %v505 = vunpack.c.h.b16 %v74
    %v506 = vunpack.c.l.b16 %v75
    %v507 = vunpack.c.h.b16 %v75
    %v508 = vunpack.c.l.b16 %v76
    %v509 = vunpack.c.h.b16 %v76
    %v510 = vunpack.c.l.b16 %v77
    %v511 = vunpack.c.h.b16 %v77
    %v512 = vunpack.c.l.b16 %v78
    %v513 = vunpack.c.h.b16 %v78
    %v514 = vunpack.c.l.b16 %v79
    %v515 = vunpack.c.h.b16 %v79
    %v516 = vunpack.c.l.b16 %v80
    %v517 = vunpack.c.h.b16 %v80
    %v518 = vunpack.c.l.b16 %v81
    %v519 = vunpack.c.h.b16 %v81
    %v520 = vunpack.c.l.b16 %v82
    %v521 = vunpack.c.h.b16 %v82
    %v522 = vunpack.c.l.b16 %v83
    %v523 = vunpack.c.h.b16 %v83
    %v524 = vunpack.c.l.b16 %v84
    %v525 = vunpack.c.h.b16 %v84
    %v526 = vunpack.c.l.b16 %v85
    %v527 = vunpack.c.h.b16 %v85
    %v528 = vunpack.c.l.b16 %v86
    %v529 = vunpack.c.h.b16 %v86
    %v530 = vunpack.c.l.b16 %v87
    %v531 = vunpack.c.h.b16 %v87
    %v532 = vunpack.c.l.b16 %v88
    %v533 = vunpack.c.h.b16 %v88
    %v534 = vunpack.c.l.b16 %v89
    %v535 = vunpack.c.h.b16 %v89
    %v536 = vunpack.c.l.b16 %v90
    %v537 = vunpack.c.h.b16 %v90
    %v538 = vunpack.c.l.b16 %v91
    %v539 = vunpack.c.h.b16 %v91
    %v540 = vunpack.c.l.b16 %v92
    %v541 = vunpack.c.h.b16 %v92
    %v542 = vunpack.c.l.b16 %v93
    %v543 = vunpack.c.h.b16 %v93
    %v544 = vunpack.c.l.b16 %v94
    %v545 = vunpack.c.h.b16 %v94
    %v546 = vunpack.c.l.b16 %v95
    %v547 = vunpack.c.h.b16 %v95
    %v548 = vunpack.c.l.b16 %v96
    %v549 = vunpack.c.h.b16 %v96
    %v550 = vunpack.c.l.b16 %v97
    %v551 = vunpack.c.h.b16 %v97
    %v552 = vunpack.c.l.b16 %v98
    %v553 = vunpack.c.h.b16 %v98
    %v554 = vunpack.c.l.b16 %v99
    %v555 = vunpack.c.h.b16 %v99
    %v556 = vunpack.c.l.b16 %v100
    %v557 = vunpack.c.h.b16 %v100
    %v558 = vunpack.c.l.b16 %v101
    %v559 = vunpack.c.h.b16 %v101
    %v560 = vunpack.c.l.b16 %v102
    %v561 = vunpack.c.h.b16 %v102
    %v562 = vunpack.c.l.b16 %v103
    %v563 = vunpack.c.h.b16 %v103
    %v564 = vunpack.c.l.b16 %v104
    %v565 = vunpack.c.h.b16 %v104
    %v566 = vunpack.c.l.b16 %v105
    %v567 = vunpack.c.h.b16 %v105
    %v568 = vunpack.c.l.b16 %v106
    %v569 = vunpack.c.h.b16 %v106
    %v570 = vunpack.c.l.b16 %v107
    %v571 = vunpack.c.h.b16 %v107
    %v572 = vunpack.c.l.b16 %v108
    %v573 = vunpack.c.h.b16 %v108
    %v574 = vunpack.c.l.b16 %v109
    %v575 = vunpack.c.h.b16 %v109
    %v576 = vunpack.c.l.b16 %v110
    %v577 = vunpack.c.h.b16 %v110
    %v578 = vunpack.c.l.b16 %v111
    %v579 = vunpack.c.h.b16 %v111
    %v580 = vunpack.c.l.b16 %v112
    %v581 = vunpack.c.h.b16 %v112
    %v582 = vunpack.c.l.b16 %v113
    %v583 = vunpack.c.h.b16 %v113
    %v584 = vunpack.c.l.b16 %v114
    %v585 = vunpack.c.h.b16 %v114
    %v586 = vunpack.c.l.b16 %v115
    %v587 = vunpack.c.h.b16 %v115
    %v588 = vunpack.c.l.b16 %v116
    %v589 = vunpack.c.h.b16 %v116
    %v590 = vunpack.c.l.b16 %v117
    %v591 = vunpack.c.h.b16 %v117
    %v592 = vunpack.c.l.b16 %v118
    %v593 = vunpack.c.h.b16 %v118
    %v594 = vunpack.c.l.b16 %v119
    %v595 = vunpack.c.h.b16 %v119
    %v596 = vunpack.c.l.b16 %v120
    %v597 = vunpack.c.h.b16 %v120
    %v598 = vunpack.c.l.b16 %v121
    %v599 = vunpack.c.h.b16 %v121
    %v600 = vunpack.c.l.b16 %v122
    %v601 = vunpack.c.h.b16 %v122
    %v602 = vunpack.c.l.b16 %v123
    %v603 = vunpack.c.h.b16 %v123
    %v604 = vunpack.c.l.b16 %v124
    %v605 = vunpack.c.h.b16 %v124
    %v606 = vunpack.c.l.b16 %v125
    %v607 = vunpack.c.h.b16 %v125
    %v608 = vunpack.c.l.b16 %v126
    %v609 = vunpack.c.h.b16 %v126
    %v610 = vunpack.c.l.b16 %v127
    %v611 = vunpack.c.h.b16 %v127
    %v612 = vunpack.c.l.b16 %v128
    %v613 = vunpack.c.h.b16 %v128
    %v614 = vunpack.c.l.b16 %v129
    %v615 = vunpack.c.h.b16 %v129
    %v616 = vunpack.c.l.b16 %v130
    %v617 = vunpack.c.h.b16 %v130
    %v618 = vunpack.c.l.b16 %v131
    %v619 = vunpack.c.h.b16 %v131
    %v620 = vunpack.c.l.b16 %v132
    %v621 = vunpack.c.h.b16 %v132
    %v622 = vunpack.c.l.b16 %v133
    %v623 = vunpack.c.h.b16 %v133
    %v624 = vunpack.c.l.b16 %v134
    %v625 = vunpack.c.h.b16 %v134
    %v626 = vunpack.c.l.b16 %v135
    %v627 = vunpack.c.h.b16 %v135
    %v628 = vunpack.c.l.b16 %v136
    %v629 = vunpack.c.h.b16 %v136
    %v630 = vunpack.c.l.b16 %v137
    %v631 = vunpack.c.h.b16 %v137
    %v632 = vunpack.c.l.b16 %v138
    %v633 = vunpack.c.h.b16 %v138
    %v634 = vunpack.c.l.b16 %v139
    %v635 = vunpack.c.h.b16 %v139
    %v636 = vunpack.c.l.b16 %v140
    %v637 = vunpack.c.h.b16 %v140
    %v638 = vunpack.c.l.b16 %v141
    %v639 = vunpack.c.h.b16 %v141
    %v640 = vunpack.c.l.b16 %v142
    %v641 = vunpack.c.h.b16 %v142
    %v642 = vunpack.c.l.b16 %v143
    %v643 = vunpack.c.h.b16 %v143
    %v644 = vunpack.c.l.b16 %v144
    %v645 = vunpack.c.h.b16 %v144
    %v646 = vunpack.c.l.b16 %v145
    %v647 = vunpack.c.h.b16 %v145
    %v648 = vunpack.c.l.b16 %v146
    %v649 = vunpack.c.h.b16 %v146
    %v650 = vunpack.c.l.b16 %v147
    %v651 = vunpack.c.h.b16 %v147
    %v652 = vunpack.c.l.b16 %v148
    %v653 = vunpack.c.h.b16 %v148
    %v654 = vunpack.c.l.b16 %v149
    %v655 = vunpack.c.h.b16 %v149
    %v656 = vunpack.c.l.b16 %v150
    %v657 = vunpack.c.h.b16 %v150
    %v658 = vunpack.c.l.b16 %v151
    %v659 = vunpack.c.h.b16 %v151
    %v660 = vunpack.c.l.b16 %v152
    %v661 = vunpack.c.h.b16 %v152
    %v662 = vunpack.c.l.b16 %v153
    %v663 = vunpack.c.h.b16 %v153
    %v664 = vunpack.c.l.b16 %v154
    %v665 = vunpack.c.h.b16 %v154
    %v666 = vunpack.c.l.b16 %v155
    %v667 = vunpack.c.h.b16 %v155
    %v668 = vunpack.c.l.b16 %v156
    %v669 = vunpack.c.h.b16 %v156
    %v670 = vunpack.c.l.b16 %v157
    %v671 = vunpack.c.h.b16 %v157
    %v672 = vunpack.c.l.b16 %v158
    %v673 = vunpack.c.h.b16 %v158
    %v674 = vunpack.c.l.b16 %v159
    %v675 = vunpack.c.h.b16 %v159
    %v676 = vunpack.c.l.b16 %v160
    %v677 = vunpack.c.h.b16 %v160
    %v678 = vunpack.c.l.b16 %v161
    %v679 = vunpack.c.h.b16 %v161
    %v680 = vunpack.c.l.b16 %v162
    %v681 = vunpack.c.h.b16 %v162
    %v682 = vunpack.c.l.b16 %v163
    %v683 = vunpack.c.h.b16 %v163
    %v684 = vunpack.c.l.b16 %v164
    %v685 = vunpack.c.h.b16 %v164
    %v686 = vunpack.c.l.b16 %v165
    %v687 = vunpack.c.h.b16 %v165
    %v688 = vunpack.c.l.b16 %v166
    %v689 = vunpack.c.h.b16 %v166
    %v690 = vunpack.c.l.b16 %v167
    %v691 = vunpack.c.h.b16 %v167
    %v692 = vunpack.c.l.b16 %v168
    %v693 = vunpack.c.h.b16 %v168
    %v694 = vunpack.c.l.b16 %v169
    %v695 = vunpack.c.h.b16 %v169
    %v696 = vunpack.c.l.b16 %v170
    %v697 = vunpack.c.h.b16 %v170
    %v698 = vunpack.c.l.b16 %v171
    %v699 = vunpack.c.h.b16 %v171
    %v700 = vunpack.c.l.b16 %v172
    %v701 = vunpack.c.h.b16 %v172
    %v702 = vunpack.c.l.b16 %v173
    %v703 = vunpack.c.h.b16 %v173
    %v704 = vunpack.c.l.b16 %v174
    %v705 = vunpack.c.h.b16 %v174
    %v706 = vunpack.c.l.b16 %v175
    %v707 = vunpack.c.h.b16 %v175
    %v708 = vunpack.c.l.b16 %v176
    %v709 = vunpack.c.h.b16 %v176
    %v710 = vunpack.c.l.b16 %v177
    %v711 = vunpack.c.h.b16 %v177
    %v712 = vunpack.c.l.b16 %v178
    %v713 = vunpack.c.h.b16 %v178
    %v714 = vunpack.c.l.b16 %v179
    %v715 = vunpack.c.h.b16 %v179
    %v716 = vunpack.c.l.b16 %v180
    %v717 = vunpack.c.h.b16 %v180
    %v718 = vunpack.c.l.b16 %v181
    %v719 = vunpack.c.h.b16 %v181
    %v720 = vunpack.c.l.b16 %v182
    %v721 = vunpack.c.h.b16 %v182
    %v722 = vunpack.c.l.b16 %v183
    %v723 = vunpack.c.h.b16 %v183
    %v724 = vunpack.c.l.b16 %v184
    %v725 = vunpack.c.h.b16 %v184
    %v726 = vunpack.c.l.b16 %v185
    %v727 = vunpack.c.h.b16 %v185
    %v728 = vunpack.c.l.b16 %v186
    %v729 = vunpack.c.h.b16 %v186
    %v730 = vunpack.c.l.b16 %v187
    %v731 = vunpack.c.h.b16 %v187
    %v732 = vunpack.c.l.b16 %v188
    %v733 = vunpack.c.h.b16 %v188
    %v734 = vunpack.c.l.b16 %v189
    %v735 = vunpack.c.h.b16 %v189
    %v736 = vunpack.c.l.b16 %v190
    %v737 = vunpack.c.h.b16 %v190
    %v738 = vunpack.c.l.b16 %v191
    %v739 = vunpack.c.h.b16 %v191
    %v740 = vunpack.c.l.b16 %v192
    %v741 = vunpack.c.h.b16 %v192
    %v742 = vunpack.c.l.b16 %v193
    %v743 = vunpack.c.h.b16 %v193
    %v744 = vunpack.c.l.b16 %v194
    %v745 = vunpack.c.h.b16 %v194
    %v746 = vunpack.c.l.b16 %v195
    %v747 = vunpack.c.h.b16 %v195
    %v748 = vunpack.c.l.b16 %v196
    %v749 = vunpack.c.h.b16 %v196
    %v750 = vunpack.c.l.b16 %v197
    %v751 = vunpack.c.h.b16 %v197
    %v752 = vunpack.c.l.b16 %v198
    %v753 = vunpack.c.h.b16 %v198
    %v754 = vunpack.c.l.b16 %v199
    %v755 = vunpack.c.h.b16 %v199
    %v756 = vunpack.c.l.b16 %v200
    %v757 = vunpack.c.h.b16 %v200
    %v758 = vunpack.c.l.b16 %v201
    %v759 = vunpack.c.h.b16 %v201
    %v760 = vunpack.c.l.b16 %v202
    %v761 = vunpack.c.h.b16 %v202
    %v762 = vunpack.c.l.b16 %v203
    %v763 = vunpack.c.h.b16 %v203
    %v764 = vunpack.c.l.b16 %v204
    %v765 = vunpack.c.h.b16 %v204
    %v766 = vunpack.c.l.b16 %v205
    %v767 = vunpack.c.h.b16 %v205
    %v768 = vunpack.c.l.b16 %v206
    %v769 = vunpack.c.h.b16 %v206
    %v770 = vunpack.c.l.b16 %v207
    %v771 = vunpack.c.h.b16 %v207
    %v772 = vunpack.c.l.b16 %v208
    %v773 = vunpack.c.h.b16 %v208
    %v774 = vunpack.c.l.b16 %v209
    %v775 = vunpack.c.h.b16 %v209
    %v776 = vunpack.c.l.b16 %v210
    %v777 = vunpack.c.h.b16 %v210
    %v778 = vunpack.c.l.b16 %v211
    %v779 = vunpack.c.h.b16 %v211
    %v780 = vunpack.c.l.b16 %v212
    %v781 = vunpack.c.h.b16 %v212
    %v782 = vunpack.c.l.b16 %v213
    %v783 = vunpack.c.h.b16 %v213
    %v784 = vunpack.c.l.b16 %v214
    %v785 = vunpack.c.h.b16 %v214
    %v786 = vunpack.c.l.b16 %v215
    %v787 = vunpack.c.h.b16 %v215
    %v788 = vunpack.c.l.b16 %v216
    %v789 = vunpack.c.h.b16 %v216
    %v790 = vunpack.c.l.b16 %v217
    %v791 = vunpack.c.h.b16 %v217
    %v792 = vunpack.c.l.b16 %v218
    %v793 = vunpack.c.h.b16 %v218
    %v794 = vunpack.c.l.b16 %v219
    %v795 = vunpack.c.h.b16 %v219
    %v796 = vpack.c.b16 %v428, %v412
    %v797 = vpack.c.b16 %v429, %v413
    %v798 = vpack.c.b16 %v430, %v414
    %v799 = vpack.c.b16 %v431, %v415
    %v800 = vpack.c.b16 %v432, %v416
    %v801 = vpack.c.b16 %v433, %v417
    %v802 = vpack.c.b16 %v434, %v418
    %v803 = vpack.c.b16 %v435, %v419
    %v804 = vpack.c.b16 %v436, %v420
    %v805 = vpack.c.b16 %v437, %v421
    %v806 = vpack.c.b16 %v438, %v422
    %v807 = vpack.c.b16 %v439, %v423
    %v808 = vpack.c.b16 %v440, %v424
    %v809 = vpack.c.b16 %v441, %v425
    %v810 = vpack.c.b16 %v442, %v426
    %v811 = vpack.c.b16 %v443, %v427
    %v812 = vpack.c.b16 %v460, %v444
    %v813 = vpack.c.b16 %v461, %v445
    %v814 = vpack.c.b16 %v462, %v446
    %v815 = vpack.c.b16 %v463, %v447
    %v816 = vpack.c.b16 %v464, %v448
    %v817 = vpack.c.b16 %v465, %v449
    %v818 = vpack.c.b16 %v466, %v450
    %v819 = vpack.c.b16 %v467, %v451
    %v820 = vpack.c.b16 %v468, %v452
    %v821 = vpack.c.b16 %v469, %v453
    %v822 = vpack.c.b16 %v470, %v454
    %v823 = vpack.c.b16 %v471, %v455
    %v824 = vpack.c.b16 %v472, %v456
    %v825 = vpack.c.b16 %v473, %v457
    %v826 = vpack.c.b16 %v474, %v458
    %v827 = vpack.c.b16 %v475, %v459
    %v828 = vpack.c.b16 %v492, %v476
    %v829 = vpack.c.b16 %v493, %v477
    %v830 = vpack.c.b16 %v494, %v478
    %v831 = vpack.c.b16 %v495, %v479
    %v832 = vpack.c.b16 %v496, %v480
    %v833 = vpack.c.b16 %v497, %v481
    %v834 = vpack.c.b16 %v498, %v482
    %v835 = vpack.c.b16 %v499, %v483
    %v836 = vpack.c.b16 %v500, %v484
    %v837 = vpack.c.b16 %v501, %v485
    %v838 = vpack.c.b16 %v502, %v486
    %v839 = vpack.c.b16 %v503, %v487
    %v840 = vpack.c.b16 %v504, %v488
    %v841 = vpack.c.b16 %v505, %v489
    %v842 = vpack.c.b16 %v506, %v490
    %v843 = vpack.c.b16 %v507, %v491
    %v844 = vpack.c.b16 %v524, %v508
    %v845 = vpack.c.b16 %v525, %v509
    %v846 = vpack.c.b16 %v526, %v510
    %v847 = vpack.c.b16 %v527, %v511
    %v848 = vpack.c.b16 %v528, %v512
    %v849 = vpack.c.b16 %v529, %v513
    %v850 = vpack.c.b16 %v530, %v514
    %v851 = vpack.c.b16 %v531, %v515
    %v852 = vpack.c.b16 %v532, %v516
    %v853 = vpack.c.b16 %v533, %v517
    %v854 = vpack.c.b16 %v534, %v518
    %v855 = vpack.c.b16 %v535, %v519
    %v856 = vpack.c.b16 %v536, %v520
    %v857 = vpack.c.b16 %v537, %v521
    %v858 = vpack.c.b16 %v538, %v522
    %v859 = vpack.c.b16 %v539, %v523
    %v860 = vpack.c.b16 %v556, %v540
    %v861 = vpack.c.b16 %v557, %v541
    %v862 = vpack.c.b16 %v558, %v542
    %v863 = vpack.c.b16 %v559, %v543
    %v864 = vpack.c.b16 %v560, %v544
    %v865 = vpack.c.b16 %v561, %v545
    %v866 = vpack.c.b16 %v562, %v546
    %v867 = vpack.c.b16 %v563, %v547
    %v868 = vpack.c.b16 %v564, %v548
    %v869 = vpack.c.b16 %v565, %v549
    %v870 = vpack.c.b16 %v566, %v550
    %v871 = vpack.c.b16 %v567, %v551
    %v872 = vpack.c.b16 %v568, %v552
    %v873 = vpack.c.b16 %v569, %v553
    %v874 = vpack.c.b16 %v570, %v554
    %v875 = vpack.c.b16 %v571, %v555
    %v876 = vpack.c.b16 %v588, %v572
    %v877 = vpack.c.b16 %v589, %v573
    %v878 = vpack.c.b16 %v590, %v574
    %v879 = vpack.c.b16 %v591, %v575
    %v880 = vpack.c.b16 %v592, %v576
    %v881 = vpack.c.b16 %v593, %v577
    %v882 = vpack.c.b16 %v594, %v578
    %v883 = vpack.c.b16 %v595, %v579
    %v884 = vpack.c.b16 %v596, %v580
    %v885 = vpack.c.b16 %v597, %v581
    %v886 = vpack.c.b16 %v598, %v582
    %v887 = vpack.c.b16 %v599, %v583
    %v888 = vpack.c.b16 %v600, %v584
    %v889 = vpack.c.b16 %v601, %v585
    %v890 = vpack.c.b16 %v602, %v586
    %v891 = vpack.c.b16 %v603, %v587
    %v892 = vpack.c.b16 %v620, %v604
    %v893 = vpack.c.b16 %v621, %v605
    %v894 = vpack.c.b16 %v622, %v606
    %v895 = vpack.c.b16 %v623, %v607
    %v896 = vpack.c.b16 %v624, %v608
    %v897 = vpack.c.b16 %v625, %v609
    %v898 = vpack.c.b16 %v626, %v610
    %v899 = vpack.c.b16 %v627, %v611
    %v900 = vpack.c.b16 %v628, %v612
    %v901 = vpack.c.b16 %v629, %v613
    %v902 = vpack.c.b16 %v630, %v614
    %v903 = vpack.c.b16 %v631, %v615
    %v904 = vpack.c.b16 %v632, %v616
    %v905 = vpack.c.b16 %v633, %v617
    %v906 = vpack.c.b16 %v634, %v618
    %v907 = vpack.c.b16 %v635, %v619
    %v908 = vpack.c.b16 %v652, %v636
    %v909 = vpack.c.b16 %v653, %v637
    %v910 = vpack.c.b16 %v654, %v638
    %v911 = vpack.c.b16 %v655, %v639
    %v912 = vpack.c.b16 %v656, %v640
    %v913 = vpack.c.b16 %v657, %v641
    %v914 = vpack.c.b16 %v658, %v642
    %v915 = vpack.c.b16 %v659, %v643
    %v916 = vpack.c.b16 %v660, %v644
    %v917 = vpack.c.b16 %v661, %v645
    %v918 = vpack.c.b16 %v662, %v646
    %v919 = vpack.c.b16 %v663, %v647
    %v920 = vpack.c.b16 %v664, %v648
    %v921 = vpack.c.b16 %v665, %v649
    %v922 = vpack.c.b16 %v666, %v650
    %v923 = vpack.c.b16 %v667, %v651
    %v924 = vpack.c.b16 %v684, %v668
    %v925 = vpack.c.b16 %v685, %v669
    %v926 = vpack.c.b16 %v686, %v670
    %v927 = vpack.c.b16 %v687, %v671
    %v928 = vpack.c.b16 %v688, %v672
    %v929 = vpack.c.b16 %v689, %v673
    %v930 = vpack.c.b16 %v690, %v674
    %v931 = vpack.c.b16 %v691, %v675
    %v932 = vpack.c.b16 %v692, %v676
    %v933 = vpack.c.b16 %v693, %v677
    %v934 = vpack.c.b16 %v694, %v678
    %v935 = vpack.c.b16 %v695, %v679
    %v936 = vpack.c.b16 %v696, %v680
    %v937 = vpack.c.b16 %v697, %v681
    %v938 = vpack.c.b16 %v698, %v682
    %v939 = vpack.c.b16 %v699, %v683
    %v940 = vpack.c.b16 %v716, %v700
    %v941 = vpack.c.b16 %v717, %v701
    %v942 = vpack.c.b16 %v718, %v702
    %v943 = vpack.c.b16 %v719, %v703
    %v944 = vpack.c.b16 %v720, %v704
    %v945 = vpack.c.b16 %v721, %v705
    %v946 = vpack.c.b16 %v722, %v706
    %v947 = vpack.c.b16 %v723, %v707
    %v948 = vpack.c.b16 %v724, %v708
    %v949 = vpack.c.b16 %v725, %v709
    %v950 = vpack.c.b16 %v726, %v710
    %v951 = vpack.c.b16 %v727, %v711
    %v952 = vpack.c.b16 %v728, %v712
    %v953 = vpack.c.b16 %v729, %v713
    %v954 = vpack.c.b16 %v730, %v714
    %v955 = vpack.c.b16 %v731, %v715
    %v956 = vpack.c.b16 %v748, %v732
    %v957 = vpack.c.b16 %v749, %v733
    %v958 = vpack.c.b16 %v750, %v734
    %v959 = vpack.c.b16 %v751, %v735
    %v960 = vpack.c.b16 %v752, %v736
    %v961 = vpack.c.b16 %v753, %v737
    %v962 = vpack.c.b16 %v754, %v738
    %v963 = vpack.c.b16 %v755, %v739
    %v964 = vpack.c.b16 %v756, %v740
    %v965 = vpack.c.b16 %v757, %v741
    %v966 = vpack.c.b16 %v758, %v742
    %v967 = vpack.c.b16 %v759, %v743
    %v968 = vpack.c.b16 %v760, %v744
    %v969 = vpack.c.b16 %v761, %v745
    %v970 = vpack.c.b16 %v762, %v746
    %v971 = vpack.c.b16 %v763, %v747
    %v972 = vpack.c.b16 %v780, %v764
    %v973 = vpack.c.b16 %v781, %v765
    %v974 = vpack.c.b16 %v782, %v766
    %v975 = vpack.c.b16 %v783, %v767
    %v976 = vpack.c.b16 %v784, %v768
    %v977 = vpack.c.b16 %v785, %v769
    %v978 = vpack.c.b16 %v786, %v770
    %v979 = vpack.c.b16 %v787, %v771
    %v980 = vpack.c.b16 %v788, %v772
    %v981 = vpack.c.b16 %v789, %v773
    %v982 = vpack.c.b16 %v790, %v774
    %v983 = vpack.c.b16 %v791, %v775
    %v984 = vpack.c.b16 %v792, %v776
    %v985 = vpack.c.b16 %v793, %v777
    %v986 = vpack.c.b16 %v794, %v778
    %v987 = vpack.c.b16 %v795, %v779
    %vm1180 = vcmask 523264
    %v1182 = vsel %vm1180, %v27, 0
    %1184 = vmatpush.bf16.msra.mxu0 %v908
    %1185 = vmatpush.bf16.msra.mxu0 %v892
    %1186 = vmatpush.bf16.msra.mxu0 %v876
    %1187 = vmatpush.bf16.msra.mxu0 %v860
    %1188 = vmatpush.bf16.msra.mxu0 %v844
    %1189 = vmatpush.bf16.msra.mxu0 %v828
    %1190 = vmatpush.bf16.msra.mxu0 %v812
    %1191 = vmatpush.bf16.msra.mxu0 %v796
    %1192 = vmatmul.bf16.gmra.mxu0 %v26
    %v1193 = vpop.f32.mrf.mxu0
    %v1194 = vadd.f32 0.0, %v1193
    %v1195 = vpop.f32.mrf.mxu0
    %v1196 = vadd.f32 0.0, %v1195
    %1197 = vdwg.mxu0
    %1198 = vmatpush.bf16.msra.mxu0 0
    %1199 = vmatpush.bf16.msra.mxu0 0
    %1200 = vmatpush.bf16.msra.mxu0 0
    %1201 = vmatpush.bf16.msra.mxu0 0
    %1202 = vmatpush.bf16.msra.mxu0 %v972
    %1203 = vmatpush.bf16.msra.mxu0 %v956
    %1204 = vmatpush.bf16.msra.mxu0 %v940
    %1205 = vmatpush.bf16.msra.mxu0 %v924
    %1206 = vmatmul.bf16.gmra.mxu0 %v1182
    %v1207 = vpop.f32.mrf.mxu0
    %v1208 = vadd.f32 %v1194, %v1207
    %v1209 = vpop.f32.mrf.mxu0
    %v1210 = vadd.f32 %v1196, %v1209
    %1211 = vdwg.mxu0
    %1212 = vmatpush.bf16.msra.mxu0 %v909
    %1213 = vmatpush.bf16.msra.mxu0 %v893
    %1214 = vmatpush.bf16.msra.mxu0 %v877
    %1215 = vmatpush.bf16.msra.mxu0 %v861
    %1216 = vmatpush.bf16.msra.mxu0 %v845
    %1217 = vmatpush.bf16.msra.mxu0 %v829
    %1218 = vmatpush.bf16.msra.mxu0 %v813
    %1219 = vmatpush.bf16.msra.mxu0 %v797
    %1220 = vmatmul.bf16.gmra.mxu0 %v26
    %v1221 = vpop.f32.mrf.mxu0
    %v1222 = vadd.f32 0.0, %v1221
    %v1223 = vpop.f32.mrf.mxu0
    %v1224 = vadd.f32 0.0, %v1223
    %1225 = vdwg.mxu0
    %1226 = vmatpush.bf16.msra.mxu0 0
    %1227 = vmatpush.bf16.msra.mxu0 0
    %1228 = vmatpush.bf16.msra.mxu0 0
    %1229 = vmatpush.bf16.msra.mxu0 0
    %1230 = vmatpush.bf16.msra.mxu0 %v973
    %1231 = vmatpush.bf16.msra.mxu0 %v957
    %1232 = vmatpush.bf16.msra.mxu0 %v941
    %1233 = vmatpush.bf16.msra.mxu0 %v925
    %1234 = vmatmul.bf16.gmra.mxu0 %v1182
    %v1235 = vpop.f32.mrf.mxu0
    %v1236 = vadd.f32 %v1222, %v1235
    %v1237 = vpop.f32.mrf.mxu0
    %v1238 = vadd.f32 %v1224, %v1237
    %1239 = vdwg.mxu0
    %1240 = vmatpush.bf16.msra.mxu0 %v910
    %1241 = vmatpush.bf16.msra.mxu0 %v894
    %1242 = vmatpush.bf16.msra.mxu0 %v878
    %1243 = vmatpush.bf16.msra.mxu0 %v862
    %1244 = vmatpush.bf16.msra.mxu0 %v846
    %1245 = vmatpush.bf16.msra.mxu0 %v830
    %1246 = vmatpush.bf16.msra.mxu0 %v814
    %1247 = vmatpush.bf16.msra.mxu0 %v798
    %1248 = vmatmul.bf16.gmra.mxu0 %v26
    %v1249 = vpop.f32.mrf.mxu0
    %v1250 = vadd.f32 0.0, %v1249
    %v1251 = vpop.f32.mrf.mxu0
    %v1252 = vadd.f32 0.0, %v1251
    %1253 = vdwg.mxu0
    %1254 = vmatpush.bf16.msra.mxu0 0
    %1255 = vmatpush.bf16.msra.mxu0 0
    %1256 = vmatpush.bf16.msra.mxu0 0
    %1257 = vmatpush.bf16.msra.mxu0 0
    %1258 = vmatpush.bf16.msra.mxu0 %v974
    %1259 = vmatpush.bf16.msra.mxu0 %v958
    %1260 = vmatpush.bf16.msra.mxu0 %v942
    %1261 = vmatpush.bf16.msra.mxu0 %v926
    %1262 = vmatmul.bf16.gmra.mxu0 %v1182
    %v1263 = vpop.f32.mrf.mxu0
    %v1264 = vadd.f32 %v1250, %v1263
    %v1265 = vpop.f32.mrf.mxu0
    %v1266 = vadd.f32 %v1252, %v1265
    %1267 = vdwg.mxu0
    %1268 = vmatpush.bf16.msra.mxu0 %v911
    %1269 = vmatpush.bf16.msra.mxu0 %v895
    %1270 = vmatpush.bf16.msra.mxu0 %v879
    %1271 = vmatpush.bf16.msra.mxu0 %v863
    %1272 = vmatpush.bf16.msra.mxu0 %v847
    %1273 = vmatpush.bf16.msra.mxu0 %v831
    %1274 = vmatpush.bf16.msra.mxu0 %v815
    %1275 = vmatpush.bf16.msra.mxu0 %v799
    %1276 = vmatmul.bf16.gmra.mxu0 %v26
    %v1277 = vpop.f32.mrf.mxu0
    %v1278 = vadd.f32 0.0, %v1277
    %v1279 = vpop.f32.mrf.mxu0
    %v1280 = vadd.f32 0.0, %v1279
    %1281 = vdwg.mxu0
    %1282 = vmatpush.bf16.msra.mxu0 0
    %1283 = vmatpush.bf16.msra.mxu0 0
    %1284 = vmatpush.bf16.msra.mxu0 0
    %1285 = vmatpush.bf16.msra.mxu0 0
    %1286 = vmatpush.bf16.msra.mxu0 %v975
    %1287 = vmatpush.bf16.msra.mxu0 %v959
    %1288 = vmatpush.bf16.msra.mxu0 %v943
    %1289 = vmatpush.bf16.msra.mxu0 %v927
    %1290 = vmatmul.bf16.gmra.mxu0 %v1182
    %v1291 = vpop.f32.mrf.mxu0
    %v1292 = vadd.f32 %v1278, %v1291
    %v1293 = vpop.f32.mrf.mxu0
    %v1294 = vadd.f32 %v1280, %v1293
    %1295 = vdwg.mxu0
    %1296 = vmatpush.bf16.msra.mxu0 %v912
    %1297 = vmatpush.bf16.msra.mxu0 %v896
    %1298 = vmatpush.bf16.msra.mxu0 %v880
    %1299 = vmatpush.bf16.msra.mxu0 %v864
    %1300 = vmatpush.bf16.msra.mxu0 %v848
    %1301 = vmatpush.bf16.msra.mxu0 %v832
    %1302 = vmatpush.bf16.msra.mxu0 %v816
    %1303 = vmatpush.bf16.msra.mxu0 %v800
    %1304 = vmatmul.bf16.gmra.mxu0 %v26
    %v1305 = vpop.f32.mrf.mxu0
    %v1306 = vadd.f32 0.0, %v1305
    %v1307 = vpop.f32.mrf.mxu0
    %v1308 = vadd.f32 0.0, %v1307
    %1309 = vdwg.mxu0
    %1310 = vmatpush.bf16.msra.mxu0 0
    %1311 = vmatpush.bf16.msra.mxu0 0
    %1312 = vmatpush.bf16.msra.mxu0 0
    %1313 = vmatpush.bf16.msra.mxu0 0
    %1314 = vmatpush.bf16.msra.mxu0 %v976
    %1315 = vmatpush.bf16.msra.mxu0 %v960
    %1316 = vmatpush.bf16.msra.mxu0 %v944
    %1317 = vmatpush.bf16.msra.mxu0 %v928
    %1318 = vmatmul.bf16.gmra.mxu0 %v1182
    %v1319 = vpop.f32.mrf.mxu0
    %v1320 = vadd.f32 %v1306, %v1319
    %v1321 = vpop.f32.mrf.mxu0
    %v1322 = vadd.f32 %v1308, %v1321
    %1323 = vdwg.mxu0
    %1324 = vmatpush.bf16.msra.mxu0 %v913
    %1325 = vmatpush.bf16.msra.mxu0 %v897
    %1326 = vmatpush.bf16.msra.mxu0 %v881
    %1327 = vmatpush.bf16.msra.mxu0 %v865
    %1328 = vmatpush.bf16.msra.mxu0 %v849
    %1329 = vmatpush.bf16.msra.mxu0 %v833
    %1330 = vmatpush.bf16.msra.mxu0 %v817
    %1331 = vmatpush.bf16.msra.mxu0 %v801
    %1332 = vmatmul.bf16.gmra.mxu0 %v26
    %v1333 = vpop.f32.mrf.mxu0
    %v1334 = vadd.f32 0.0, %v1333
    %v1335 = vpop.f32.mrf.mxu0
    %v1336 = vadd.f32 0.0, %v1335
    %1337 = vdwg.mxu0
    %1338 = vmatpush.bf16.msra.mxu0 0
    %1339 = vmatpush.bf16.msra.mxu0 0
    %1340 = vmatpush.bf16.msra.mxu0 0
    %1341 = vmatpush.bf16.msra.mxu0 0
    %1342 = vmatpush.bf16.msra.mxu0 %v977
    %1343 = vmatpush.bf16.msra.mxu0 %v961
    %1344 = vmatpush.bf16.msra.mxu0 %v945
    %1345 = vmatpush.bf16.msra.mxu0 %v929
    %1346 = vmatmul.bf16.gmra.mxu0 %v1182
    %v1347 = vpop.f32.mrf.mxu0
    %v1348 = vadd.f32 %v1334, %v1347
    %v1349 = vpop.f32.mrf.mxu0
    %v1350 = vadd.f32 %v1336, %v1349
    %1351 = vdwg.mxu0
    %1352 = vmatpush.bf16.msra.mxu0 %v914
    %1353 = vmatpush.bf16.msra.mxu0 %v898
    %1354 = vmatpush.bf16.msra.mxu0 %v882
    %1355 = vmatpush.bf16.msra.mxu0 %v866
    %1356 = vmatpush.bf16.msra.mxu0 %v850
    %1357 = vmatpush.bf16.msra.mxu0 %v834
    %1358 = vmatpush.bf16.msra.mxu0 %v818
    %1359 = vmatpush.bf16.msra.mxu0 %v802
    %1360 = vmatmul.bf16.gmra.mxu0 %v26
    %v1361 = vpop.f32.mrf.mxu0
    %v1362 = vadd.f32 0.0, %v1361
    %v1363 = vpop.f32.mrf.mxu0
    %v1364 = vadd.f32 0.0, %v1363
    %1365 = vdwg.mxu0
    %1366 = vmatpush.bf16.msra.mxu0 0
    %1367 = vmatpush.bf16.msra.mxu0 0
    %1368 = vmatpush.bf16.msra.mxu0 0
    %1369 = vmatpush.bf16.msra.mxu0 0
    %1370 = vmatpush.bf16.msra.mxu0 %v978
    %1371 = vmatpush.bf16.msra.mxu0 %v962
    %1372 = vmatpush.bf16.msra.mxu0 %v946
    %1373 = vmatpush.bf16.msra.mxu0 %v930
    %1374 = vmatmul.bf16.gmra.mxu0 %v1182
    %v1375 = vpop.f32.mrf.mxu0
    %v1376 = vadd.f32 %v1362, %v1375
    %v1377 = vpop.f32.mrf.mxu0
    %v1378 = vadd.f32 %v1364, %v1377
    %1379 = vdwg.mxu0
    %1380 = vmatpush.bf16.msra.mxu0 %v915
    %1381 = vmatpush.bf16.msra.mxu0 %v899
    %1382 = vmatpush.bf16.msra.mxu0 %v883
    %1383 = vmatpush.bf16.msra.mxu0 %v867
    %1384 = vmatpush.bf16.msra.mxu0 %v851
    %1385 = vmatpush.bf16.msra.mxu0 %v835
    %1386 = vmatpush.bf16.msra.mxu0 %v819
    %1387 = vmatpush.bf16.msra.mxu0 %v803
    %1388 = vmatmul.bf16.gmra.mxu0 %v26
    %v1389 = vpop.f32.mrf.mxu0
    %v1390 = vadd.f32 0.0, %v1389
    %v1391 = vpop.f32.mrf.mxu0
    %v1392 = vadd.f32 0.0, %v1391
    %1393 = vdwg.mxu0
    %1394 = vmatpush.bf16.msra.mxu0 0
    %1395 = vmatpush.bf16.msra.mxu0 0
    %1396 = vmatpush.bf16.msra.mxu0 0
    %1397 = vmatpush.bf16.msra.mxu0 0
    %1398 = vmatpush.bf16.msra.mxu0 %v979
    %1399 = vmatpush.bf16.msra.mxu0 %v963
    %1400 = vmatpush.bf16.msra.mxu0 %v947
    %1401 = vmatpush.bf16.msra.mxu0 %v931
    %1402 = vmatmul.bf16.gmra.mxu0 %v1182
    %v1403 = vpop.f32.mrf.mxu0
    %v1404 = vadd.f32 %v1390, %v1403
    %v1405 = vpop.f32.mrf.mxu0
    %v1406 = vadd.f32 %v1392, %v1405
    %1407 = vdwg.mxu0
    %1408 = vmatpush.bf16.msra.mxu0 %v916
    %1409 = vmatpush.bf16.msra.mxu0 %v900
    %1410 = vmatpush.bf16.msra.mxu0 %v884
    %1411 = vmatpush.bf16.msra.mxu0 %v868
    %1412 = vmatpush.bf16.msra.mxu0 %v852
    %1413 = vmatpush.bf16.msra.mxu0 %v836
    %1414 = vmatpush.bf16.msra.mxu0 %v820
    %1415 = vmatpush.bf16.msra.mxu0 %v804
    %1416 = vmatmul.bf16.gmra.mxu0 %v26
    %v1417 = vpop.f32.mrf.mxu0
    %v1418 = vadd.f32 0.0, %v1417
    %v1419 = vpop.f32.mrf.mxu0
    %v1420 = vadd.f32 0.0, %v1419
    %1421 = vdwg.mxu0
    %1422 = vmatpush.bf16.msra.mxu0 0
    %1423 = vmatpush.bf16.msra.mxu0 0
    %1424 = vmatpush.bf16.msra.mxu0 0
    %1425 = vmatpush.bf16.msra.mxu0 0
    %1426 = vmatpush.bf16.msra.mxu0 %v980
    %1427 = vmatpush.bf16.msra.mxu0 %v964
    %1428 = vmatpush.bf16.msra.mxu0 %v948
    %1429 = vmatpush.bf16.msra.mxu0 %v932
    %1430 = vmatmul.bf16.gmra.mxu0 %v1182
    %v1431 = vpop.f32.mrf.mxu0
    %v1432 = vadd.f32 %v1418, %v1431
    %v1433 = vpop.f32.mrf.mxu0
    %v1434 = vadd.f32 %v1420, %v1433
    %1435 = vdwg.mxu0
    %1436 = vmatpush.bf16.msra.mxu0 %v917
    %1437 = vmatpush.bf16.msra.mxu0 %v901
    %1438 = vmatpush.bf16.msra.mxu0 %v885
    %1439 = vmatpush.bf16.msra.mxu0 %v869
    %1440 = vmatpush.bf16.msra.mxu0 %v853
    %1441 = vmatpush.bf16.msra.mxu0 %v837
    %1442 = vmatpush.bf16.msra.mxu0 %v821
    %1443 = vmatpush.bf16.msra.mxu0 %v805
    %1444 = vmatmul.bf16.gmra.mxu0 %v26
    %v1445 = vpop.f32.mrf.mxu0
    %v1446 = vadd.f32 0.0, %v1445
    %v1447 = vpop.f32.mrf.mxu0
    %v1448 = vadd.f32 0.0, %v1447
    %1449 = vdwg.mxu0
    %1450 = vmatpush.bf16.msra.mxu0 0
    %1451 = vmatpush.bf16.msra.mxu0 0
    %1452 = vmatpush.bf16.msra.mxu0 0
    %1453 = vmatpush.bf16.msra.mxu0 0
    %1454 = vmatpush.bf16.msra.mxu0 %v981
    %1455 = vmatpush.bf16.msra.mxu0 %v965
    %1456 = vmatpush.bf16.msra.mxu0 %v949
    %1457 = vmatpush.bf16.msra.mxu0 %v933
    %1458 = vmatmul.bf16.gmra.mxu0 %v1182
    %v1459 = vpop.f32.mrf.mxu0
    %v1460 = vadd.f32 %v1446, %v1459
    %v1461 = vpop.f32.mrf.mxu0
    %v1462 = vadd.f32 %v1448, %v1461
    %1463 = vdwg.mxu0
    %1464 = vmatpush.bf16.msra.mxu0 %v918
    %1465 = vmatpush.bf16.msra.mxu0 %v902
    %1466 = vmatpush.bf16.msra.mxu0 %v886
    %1467 = vmatpush.bf16.msra.mxu0 %v870
    %1468 = vmatpush.bf16.msra.mxu0 %v854
    %1469 = vmatpush.bf16.msra.mxu0 %v838
    %1470 = vmatpush.bf16.msra.mxu0 %v822
    %1471 = vmatpush.bf16.msra.mxu0 %v806
    %1472 = vmatmul.bf16.gmra.mxu0 %v26
    %v1473 = vpop.f32.mrf.mxu0
    %v1474 = vadd.f32 0.0, %v1473
    %v1475 = vpop.f32.mrf.mxu0
    %v1476 = vadd.f32 0.0, %v1475
    %1477 = vdwg.mxu0
    %1478 = vmatpush.bf16.msra.mxu0 0
    %1479 = vmatpush.bf16.msra.mxu0 0
    %1480 = vmatpush.bf16.msra.mxu0 0
    %1481 = vmatpush.bf16.msra.mxu0 0
    %1482 = vmatpush.bf16.msra.mxu0 %v982
    %1483 = vmatpush.bf16.msra.mxu0 %v966
    %1484 = vmatpush.bf16.msra.mxu0 %v950
    %1485 = vmatpush.bf16.msra.mxu0 %v934
    %1486 = vmatmul.bf16.gmra.mxu0 %v1182
    %v1487 = vpop.f32.mrf.mxu0
    %v1488 = vadd.f32 %v1474, %v1487
    %v1489 = vpop.f32.mrf.mxu0
    %v1490 = vadd.f32 %v1476, %v1489
    %1491 = vdwg.mxu0
    %1492 = vmatpush.bf16.msra.mxu0 %v919
    %1493 = vmatpush.bf16.msra.mxu0 %v903
    %1494 = vmatpush.bf16.msra.mxu0 %v887
    %1495 = vmatpush.bf16.msra.mxu0 %v871
    %1496 = vmatpush.bf16.msra.mxu0 %v855
    %1497 = vmatpush.bf16.msra.mxu0 %v839
    %1498 = vmatpush.bf16.msra.mxu0 %v823
    %1499 = vmatpush.bf16.msra.mxu0 %v807
    %1500 = vmatmul.bf16.gmra.mxu0 %v26
    %v1501 = vpop.f32.mrf.mxu0
    %v1502 = vadd.f32 0.0, %v1501
    %v1503 = vpop.f32.mrf.mxu0
    %v1504 = vadd.f32 0.0, %v1503
    %1505 = vdwg.mxu0
    %1506 = vmatpush.bf16.msra.mxu0 0
    %1507 = vmatpush.bf16.msra.mxu0 0
    %1508 = vmatpush.bf16.msra.mxu0 0
    %1509 = vmatpush.bf16.msra.mxu0 0
    %1510 = vmatpush.bf16.msra.mxu0 %v983
    %1511 = vmatpush.bf16.msra.mxu0 %v967
    %1512 = vmatpush.bf16.msra.mxu0 %v951
    %1513 = vmatpush.bf16.msra.mxu0 %v935
    %1514 = vmatmul.bf16.gmra.mxu0 %v1182
    %v1515 = vpop.f32.mrf.mxu0
    %v1516 = vadd.f32 %v1502, %v1515
    %v1517 = vpop.f32.mrf.mxu0
    %v1518 = vadd.f32 %v1504, %v1517
    %1519 = vdwg.mxu0
    %1520 = vmatpush.bf16.msra.mxu0 %v920
    %1521 = vmatpush.bf16.msra.mxu0 %v904
    %1522 = vmatpush.bf16.msra.mxu0 %v888
    %1523 = vmatpush.bf16.msra.mxu0 %v872
    %1524 = vmatpush.bf16.msra.mxu0 %v856
    %1525 = vmatpush.bf16.msra.mxu0 %v840
    %1526 = vmatpush.bf16.msra.mxu0 %v824
    %1527 = vmatpush.bf16.msra.mxu0 %v808
    %1528 = vmatmul.bf16.gmra.mxu0 %v26
    %v1529 = vpop.f32.mrf.mxu0
    %v1530 = vadd.f32 0.0, %v1529
    %v1531 = vpop.f32.mrf.mxu0
    %v1532 = vadd.f32 0.0, %v1531
    %1533 = vdwg.mxu0
    %1534 = vmatpush.bf16.msra.mxu0 0
    %1535 = vmatpush.bf16.msra.mxu0 0
    %1536 = vmatpush.bf16.msra.mxu0 0
    %1537 = vmatpush.bf16.msra.mxu0 0
    %1538 = vmatpush.bf16.msra.mxu0 %v984
    %1539 = vmatpush.bf16.msra.mxu0 %v968
    %1540 = vmatpush.bf16.msra.mxu0 %v952
    %1541 = vmatpush.bf16.msra.mxu0 %v936
    %1542 = vmatmul.bf16.gmra.mxu0 %v1182
    %v1543 = vpop.f32.mrf.mxu0
    %v1544 = vadd.f32 %v1530, %v1543
    %v1545 = vpop.f32.mrf.mxu0
    %v1546 = vadd.f32 %v1532, %v1545
    %1547 = vdwg.mxu0
    %1548 = vmatpush.bf16.msra.mxu0 %v921
    %1549 = vmatpush.bf16.msra.mxu0 %v905
    %1550 = vmatpush.bf16.msra.mxu0 %v889
    %1551 = vmatpush.bf16.msra.mxu0 %v873
    %1552 = vmatpush.bf16.msra.mxu0 %v857
    %1553 = vmatpush.bf16.msra.mxu0 %v841
    %1554 = vmatpush.bf16.msra.mxu0 %v825
    %1555 = vmatpush.bf16.msra.mxu0 %v809
    %1556 = vmatmul.bf16.gmra.mxu0 %v26
    %v1557 = vpop.f32.mrf.mxu0
    %v1558 = vadd.f32 0.0, %v1557
    %v1559 = vpop.f32.mrf.mxu0
    %v1560 = vadd.f32 0.0, %v1559
    %1561 = vdwg.mxu0
    %1562 = vmatpush.bf16.msra.mxu0 0
    %1563 = vmatpush.bf16.msra.mxu0 0
    %1564 = vmatpush.bf16.msra.mxu0 0
    %1565 = vmatpush.bf16.msra.mxu0 0
    %1566 = vmatpush.bf16.msra.mxu0 %v985
    %1567 = vmatpush.bf16.msra.mxu0 %v969
    %1568 = vmatpush.bf16.msra.mxu0 %v953
    %1569 = vmatpush.bf16.msra.mxu0 %v937
    %1570 = vmatmul.bf16.gmra.mxu0 %v1182
    %v1571 = vpop.f32.mrf.mxu0
    %v1572 = vadd.f32 %v1558, %v1571
    %v1573 = vpop.f32.mrf.mxu0
    %v1574 = vadd.f32 %v1560, %v1573
    %1575 = vdwg.mxu0
    %1576 = vmatpush.bf16.msra.mxu0 %v922
    %1577 = vmatpush.bf16.msra.mxu0 %v906
    %1578 = vmatpush.bf16.msra.mxu0 %v890
    %1579 = vmatpush.bf16.msra.mxu0 %v874
    %1580 = vmatpush.bf16.msra.mxu0 %v858
    %1581 = vmatpush.bf16.msra.mxu0 %v842
    %1582 = vmatpush.bf16.msra.mxu0 %v826
    %1583 = vmatpush.bf16.msra.mxu0 %v810
    %1584 = vmatmul.bf16.gmra.mxu0 %v26
    %v1585 = vpop.f32.mrf.mxu0
    %v1586 = vadd.f32 0.0, %v1585
    %v1587 = vpop.f32.mrf.mxu0
    %v1588 = vadd.f32 0.0, %v1587
    %1589 = vdwg.mxu0
    %1590 = vmatpush.bf16.msra.mxu0 0
    %1591 = vmatpush.bf16.msra.mxu0 0
    %1592 = vmatpush.bf16.msra.mxu0 0
    %1593 = vmatpush.bf16.msra.mxu0 0
    %1594 = vmatpush.bf16.msra.mxu0 %v986
    %1595 = vmatpush.bf16.msra.mxu0 %v970
    %1596 = vmatpush.bf16.msra.mxu0 %v954
    %1597 = vmatpush.bf16.msra.mxu0 %v938
    %1598 = vmatmul.bf16.gmra.mxu0 %v1182
    %v1599 = vpop.f32.mrf.mxu0
    %v1600 = vadd.f32 %v1586, %v1599
    %v1601 = vpop.f32.mrf.mxu0
    %v1602 = vadd.f32 %v1588, %v1601
    %1603 = vdwg.mxu0
    %1604 = vmatpush.bf16.msra.mxu0 %v923
    %1605 = vmatpush.bf16.msra.mxu0 %v907
    %1606 = vmatpush.bf16.msra.mxu0 %v891
    %1607 = vmatpush.bf16.msra.mxu0 %v875
    %1608 = vmatpush.bf16.msra.mxu0 %v859
    %1609 = vmatpush.bf16.msra.mxu0 %v843
    %1610 = vmatpush.bf16.msra.mxu0 %v827
    %1611 = vmatpush.bf16.msra.mxu0 %v811
    %1612 = vmatmul.bf16.gmra.mxu0 %v26
    %v1613 = vpop.f32.mrf.mxu0
    %v1614 = vadd.f32 0.0, %v1613
    %v1615 = vpop.f32.mrf.mxu0
    %v1616 = vadd.f32 0.0, %v1615
    %1617 = vdwg.mxu0
    %1618 = vmatpush.bf16.msra.mxu0 0
    %1619 = vmatpush.bf16.msra.mxu0 0
    %1620 = vmatpush.bf16.msra.mxu0 0
    %1621 = vmatpush.bf16.msra.mxu0 0
    %1622 = vmatpush.bf16.msra.mxu0 %v987
    %1623 = vmatpush.bf16.msra.mxu0 %v971
    %1624 = vmatpush.bf16.msra.mxu0 %v955
    %1625 = vmatpush.bf16.msra.mxu0 %v939
    %1626 = vmatmul.bf16.gmra.mxu0 %v1182
    %v1627 = vpop.f32.mrf.mxu0
    %v1628 = vadd.f32 %v1614, %v1627
    %v1629 = vpop.f32.mrf.mxu0
    %v1630 = vadd.f32 %v1616, %v1629
    %1631 = vdwg.mxu0
    %v1632 = vmax.f32 %v1208, 0.0
    %v1633 = vmax.f32 %v1236, 0.0
    %v1634 = vmax.f32 %v1264, 0.0
    %v1635 = vmax.f32 %v1292, 0.0
    %v1636 = vmax.f32 %v1320, 0.0
    %v1637 = vmax.f32 %v1348, 0.0
    %v1638 = vmax.f32 %v1376, 0.0
    %v1639 = vmax.f32 %v1404, 0.0
    %v1640 = vmax.f32 %v1432, 0.0
    %v1641 = vmax.f32 %v1460, 0.0
    %v1642 = vmax.f32 %v1488, 0.0
    %v1643 = vmax.f32 %v1516, 0.0
    %v1644 = vmax.f32 %v1544, 0.0
    %v1645 = vmax.f32 %v1572, 0.0
    %v1646 = vmax.f32 %v1600, 0.0
    %v1647 = vmax.f32 %v1628, 0.0
    %v1648 = vmax.f32 %v1210, 0.0
    %v1649 = vmax.f32 %v1238, 0.0
    %v1650 = vmax.f32 %v1266, 0.0
    %v1651 = vmax.f32 %v1294, 0.0
    %v1652 = vmax.f32 %v1322, 0.0
    %v1653 = vmax.f32 %v1350, 0.0
    %v1654 = vmax.f32 %v1378, 0.0
    %v1655 = vmax.f32 %v1406, 0.0
    %v1656 = vmax.f32 %v1434, 0.0
    %v1657 = vmax.f32 %v1462, 0.0
    %v1658 = vmax.f32 %v1490, 0.0
    %v1659 = vmax.f32 %v1518, 0.0
    %v1660 = vmax.f32 %v1546, 0.0
    %v1661 = vmax.f32 %v1574, 0.0
    %v1662 = vmax.f32 %v1602, 0.0
    %v1663 = vmax.f32 %v1630, 0.0
    %v1664 = vpack.c.bf16 %v1648, %v1632
    %v1665 = vpack.c.bf16 %v1649, %v1633
    %v1666 = vpack.c.bf16 %v1650, %v1634
    %v1667 = vpack.c.bf16 %v1651, %v1635
    %v1668 = vpack.c.bf16 %v1652, %v1636
    %v1669 = vpack.c.bf16 %v1653, %v1637
    %v1670 = vpack.c.bf16 %v1654, %v1638
    %v1671 = vpack.c.bf16 %v1655, %v1639
    %v1672 = vpack.c.bf16 %v1656, %v1640
    %v1673 = vpack.c.bf16 %v1657, %v1641
    %v1674 = vpack.c.bf16 %v1658, %v1642
    %v1675 = vpack.c.bf16 %v1659, %v1643
    %v1676 = vpack.c.bf16 %v1660, %v1644
    %v1677 = vpack.c.bf16 %v1661, %v1645
    %v1678 = vpack.c.bf16 %v1662, %v1646
    %v1679 = vpack.c.bf16 %v1663, %v1647
    %v1680 = vld [vmem:[%s2] sm:$0xff]
    %v1681 = vld [vmem:[%s2 + $0x8] sm:$0xff]
    %v1682 = vld [vmem:[%s2 + $0x10] sm:$0xff]
    %v1683 = vld [vmem:[%s2 + $0x18] sm:$0xff]
    %v1684 = vld [vmem:[%s2 + $0x20] sm:$0xff]
    %v1685 = vld [vmem:[%s2 + $0x28] sm:$0xff]
    %v1686 = vld [vmem:[%s2 + $0x30] sm:$0xff]
    %v1687 = vld [vmem:[%s2 + $0x38] sm:$0xff]
    %v1688 = vld [vmem:[%s2 + $0x40] sm:$0xff]
    %v1689 = vld [vmem:[%s2 + $0x48] sm:$0xff]
    %v1690 = vld [vmem:[%s2 + $0x50] sm:$0xff]
    %v1691 = vld [vmem:[%s2 + $0x58] sm:$0xff]
    %v1692 = vld [vmem:[%s2 + $0x60] sm:$0xff]
    %v1693 = vld [vmem:[%s2 + $0x68] sm:$0xff]
    %v1694 = vld [vmem:[%s2 + $0x70] sm:$0xff]
    %v1695 = vld [vmem:[%s2 + $0x78] sm:$0xff]
    %v1696 = vld [vmem:[%s2 + $0x80] sm:$0xff]
    %v1697 = vld [vmem:[%s2 + $0x88] sm:$0xff]
    %v1698 = vld [vmem:[%s2 + $0x90] sm:$0xff]
    %v1699 = vld [vmem:[%s2 + $0x98] sm:$0xff]
    %v1700 = vld [vmem:[%s2 + $0xa0] sm:$0xff]
    %v1701 = vld [vmem:[%s2 + $0xa8] sm:$0xff]
    %v1702 = vld [vmem:[%s2 + $0xb0] sm:$0xff]
    %v1703 = vld [vmem:[%s2 + $0xb8] sm:$0xff]
    %v1704 = vld [vmem:[%s2 + $0xc0] sm:$0xff]
    %v1705 = vld [vmem:[%s2 + $0xc8] sm:$0xff]
    %v1706 = vld [vmem:[%s2 + $0xd0] sm:$0xff]
    %v1707 = vld [vmem:[%s2 + $0xd8] sm:$0xff]
    %v1708 = vld [vmem:[%s2 + $0xe0] sm:$0xff]
    %v1709 = vld [vmem:[%s2 + $0xe8] sm:$0xff]
    %v1710 = vld [vmem:[%s2 + $0xf0] sm:$0xff]
    %v1711 = vld [vmem:[%s2 + $0xf8] sm:$0xff]
    %v1712 = vld [vmem:[%s2 + $0x100] sm:$0xff]
    %v1713 = vld [vmem:[%s2 + $0x108] sm:$0xff]
    %v1714 = vld [vmem:[%s2 + $0x110] sm:$0xff]
    %v1715 = vld [vmem:[%s2 + $0x118] sm:$0xff]
    %v1716 = vld [vmem:[%s2 + $0x120] sm:$0xff]
    %v1717 = vld [vmem:[%s2 + $0x128] sm:$0xff]
    %v1718 = vld [vmem:[%s2 + $0x130] sm:$0xff]
    %v1719 = vld [vmem:[%s2 + $0x138] sm:$0xff]
    %v1720 = vld [vmem:[%s2 + $0x140] sm:$0xff]
    %v1721 = vld [vmem:[%s2 + $0x148] sm:$0xff]
    %v1722 = vld [vmem:[%s2 + $0x150] sm:$0xff]
    %v1723 = vld [vmem:[%s2 + $0x158] sm:$0xff]
    %v1724 = vld [vmem:[%s2 + $0x160] sm:$0xff]
    %v1725 = vld [vmem:[%s2 + $0x168] sm:$0xff]
    %v1726 = vld [vmem:[%s2 + $0x170] sm:$0xff]
    %v1727 = vld [vmem:[%s2 + $0x178] sm:$0xff]
    %v1728 = vld [vmem:[%s2 + $0x180] sm:$0xff]
    %v1729 = vld [vmem:[%s2 + $0x188] sm:$0xff]
    %v1730 = vld [vmem:[%s2 + $0x190] sm:$0xff]
    %v1731 = vld [vmem:[%s2 + $0x198] sm:$0xff]
    %v1732 = vld [vmem:[%s2 + $0x1a0] sm:$0xff]
    %v1733 = vld [vmem:[%s2 + $0x1a8] sm:$0xff]
    %v1734 = vld [vmem:[%s2 + $0x1b0] sm:$0xff]
    %v1735 = vld [vmem:[%s2 + $0x1b8] sm:$0xff]
    %v1736 = vld [vmem:[%s2 + $0x1c0] sm:$0xff]
    %v1737 = vld [vmem:[%s2 + $0x1c8] sm:$0xff]
    %v1738 = vld [vmem:[%s2 + $0x1d0] sm:$0xff]
    %v1739 = vld [vmem:[%s2 + $0x1d8] sm:$0xff]
    %v1740 = vld [vmem:[%s2 + $0x1e0] sm:$0xff]
    %v1741 = vld [vmem:[%s2 + $0x1e8] sm:$0xff]
    %v1742 = vld [vmem:[%s2 + $0x1f0] sm:$0xff]
    %v1743 = vld [vmem:[%s2 + $0x1f8] sm:$0xff]
    %v1744 = vld [vmem:[%s2 + $0x200] sm:$0xff]
    %v1745 = vld [vmem:[%s2 + $0x208] sm:$0xff]
    %v1746 = vld [vmem:[%s2 + $0x210] sm:$0xff]
    %v1747 = vld [vmem:[%s2 + $0x218] sm:$0xff]
    %v1748 = vld [vmem:[%s2 + $0x220] sm:$0xff]
    %v1749 = vld [vmem:[%s2 + $0x228] sm:$0xff]
    %v1750 = vld [vmem:[%s2 + $0x230] sm:$0xff]
    %v1751 = vld [vmem:[%s2 + $0x238] sm:$0xff]
    %v1752 = vld [vmem:[%s2 + $0x240] sm:$0xff]
    %v1753 = vld [vmem:[%s2 + $0x248] sm:$0xff]
    %v1754 = vld [vmem:[%s2 + $0x250] sm:$0xff]
    %v1755 = vld [vmem:[%s2 + $0x258] sm:$0xff]
    %v1756 = vld [vmem:[%s2 + $0x260] sm:$0xff]
    %v1757 = vld [vmem:[%s2 + $0x268] sm:$0xff]
    %v1758 = vld [vmem:[%s2 + $0x270] sm:$0xff]
    %v1759 = vld [vmem:[%s2 + $0x278] sm:$0xff]
    %v1760 = vld [vmem:[%s2 + $0x280] sm:$0xff]
    %v1761 = vld [vmem:[%s2 + $0x288] sm:$0xff]
    %v1762 = vld [vmem:[%s2 + $0x290] sm:$0xff]
    %v1763 = vld [vmem:[%s2 + $0x298] sm:$0xff]
    %v1764 = vld [vmem:[%s2 + $0x2a0] sm:$0xff]
    %v1765 = vld [vmem:[%s2 + $0x2a8] sm:$0xff]
    %v1766 = vld [vmem:[%s2 + $0x2b0] sm:$0xff]
    %v1767 = vld [vmem:[%s2 + $0x2b8] sm:$0xff]
    %v1768 = vld [vmem:[%s2 + $0x2c0] sm:$0xff]
    %v1769 = vld [vmem:[%s2 + $0x2c8] sm:$0xff]
    %v1770 = vld [vmem:[%s2 + $0x2d0] sm:$0xff]
    %v1771 = vld [vmem:[%s2 + $0x2d8] sm:$0xff]
    %v1772 = vld [vmem:[%s2 + $0x2e0] sm:$0xff]
    %v1773 = vld [vmem:[%s2 + $0x2e8] sm:$0xff]
    %v1774 = vld [vmem:[%s2 + $0x2f0] sm:$0xff]
    %v1775 = vld [vmem:[%s2 + $0x2f8] sm:$0xff]
    %v1776 = vld [vmem:[%s2 + $0x300] sm:$0xff]
    %v1777 = vld [vmem:[%s2 + $0x308] sm:$0xff]
    %v1778 = vld [vmem:[%s2 + $0x310] sm:$0xff]
    %v1779 = vld [vmem:[%s2 + $0x318] sm:$0xff]
    %v1780 = vld [vmem:[%s2 + $0x320] sm:$0xff]
    %v1781 = vld [vmem:[%s2 + $0x328] sm:$0xff]
    %v1782 = vld [vmem:[%s2 + $0x330] sm:$0xff]
    %v1783 = vld [vmem:[%s2 + $0x338] sm:$0xff]
    %v1784 = vld [vmem:[%s2 + $0x340] sm:$0xff]
    %v1785 = vld [vmem:[%s2 + $0x348] sm:$0xff]
    %v1786 = vld [vmem:[%s2 + $0x350] sm:$0xff]
    %v1787 = vld [vmem:[%s2 + $0x358] sm:$0xff]
    %v1788 = vld [vmem:[%s2 + $0x360] sm:$0xff]
    %v1789 = vld [vmem:[%s2 + $0x368] sm:$0xff]
    %v1790 = vld [vmem:[%s2 + $0x370] sm:$0xff]
    %v1791 = vld [vmem:[%s2 + $0x378] sm:$0xff]
    %v1792 = vld [vmem:[%s2 + $0x380] sm:$0xff]
    %v1793 = vld [vmem:[%s2 + $0x388] sm:$0xff]
    %v1794 = vld [vmem:[%s2 + $0x390] sm:$0xff]
    %v1795 = vld [vmem:[%s2 + $0x398] sm:$0xff]
    %v1796 = vld [vmem:[%s2 + $0x3a0] sm:$0xff]
    %v1797 = vld [vmem:[%s2 + $0x3a8] sm:$0xff]
    %v1798 = vld [vmem:[%s2 + $0x3b0] sm:$0xff]
    %v1799 = vld [vmem:[%s2 + $0x3b8] sm:$0xff]
    %v1800 = vld [vmem:[%s2 + $0x3c0] sm:$0xff]
    %v1801 = vld [vmem:[%s2 + $0x3c8] sm:$0xff]
    %v1802 = vld [vmem:[%s2 + $0x3d0] sm:$0xff]
    %v1803 = vld [vmem:[%s2 + $0x3d8] sm:$0xff]
    %v1804 = vld [vmem:[%s2 + $0x3e0] sm:$0xff]
    %v1805 = vld [vmem:[%s2 + $0x3e8] sm:$0xff]
    %v1806 = vld [vmem:[%s2 + $0x3f0] sm:$0xff]
    %v1807 = vld [vmem:[%s2 + $0x3f8] sm:$0xff]
    %v1808 = vld [vmem:[%s2 + $0x400] sm:$0xff]
    %v1809 = vld [vmem:[%s2 + $0x408] sm:$0xff]
    %v1810 = vld [vmem:[%s2 + $0x410] sm:$0xff]
    %v1811 = vld [vmem:[%s2 + $0x418] sm:$0xff]
    %v1812 = vld [vmem:[%s2 + $0x420] sm:$0xff]
    %v1813 = vld [vmem:[%s2 + $0x428] sm:$0xff]
    %v1814 = vld [vmem:[%s2 + $0x430] sm:$0xff]
    %v1815 = vld [vmem:[%s2 + $0x438] sm:$0xff]
    %v1816 = vld [vmem:[%s2 + $0x440] sm:$0xff]
    %v1817 = vld [vmem:[%s2 + $0x448] sm:$0xff]
    %v1818 = vld [vmem:[%s2 + $0x450] sm:$0xff]
    %v1819 = vld [vmem:[%s2 + $0x458] sm:$0xff]
    %v1820 = vld [vmem:[%s2 + $0x460] sm:$0xff]
    %v1821 = vld [vmem:[%s2 + $0x468] sm:$0xff]
    %v1822 = vld [vmem:[%s2 + $0x470] sm:$0xff]
    %v1823 = vld [vmem:[%s2 + $0x478] sm:$0xff]
    %v1824 = vld [vmem:[%s2 + $0x480] sm:$0xff]
    %v1825 = vld [vmem:[%s2 + $0x488] sm:$0xff]
    %v1826 = vld [vmem:[%s2 + $0x490] sm:$0xff]
    %v1827 = vld [vmem:[%s2 + $0x498] sm:$0xff]
    %v1828 = vld [vmem:[%s2 + $0x4a0] sm:$0xff]
    %v1829 = vld [vmem:[%s2 + $0x4a8] sm:$0xff]
    %v1830 = vld [vmem:[%s2 + $0x4b0] sm:$0xff]
    %v1831 = vld [vmem:[%s2 + $0x4b8] sm:$0xff]
    %v1832 = vld [vmem:[%s2 + $0x4c0] sm:$0xff]
    %v1833 = vld [vmem:[%s2 + $0x4c8] sm:$0xff]
    %v1834 = vld [vmem:[%s2 + $0x4d0] sm:$0xff]
    %v1835 = vld [vmem:[%s2 + $0x4d8] sm:$0xff]
    %v1836 = vld [vmem:[%s2 + $0x4e0] sm:$0xff]
    %v1837 = vld [vmem:[%s2 + $0x4e8] sm:$0xff]
    %v1838 = vld [vmem:[%s2 + $0x4f0] sm:$0xff]
    %v1839 = vld [vmem:[%s2 + $0x4f8] sm:$0xff]
    %v1840 = vld [vmem:[%s2 + $0x500] sm:$0xff]
    %v1841 = vld [vmem:[%s2 + $0x508] sm:$0xff]
    %v1842 = vld [vmem:[%s2 + $0x510] sm:$0xff]
    %v1843 = vld [vmem:[%s2 + $0x518] sm:$0xff]
    %v1844 = vld [vmem:[%s2 + $0x520] sm:$0xff]
    %v1845 = vld [vmem:[%s2 + $0x528] sm:$0xff]
    %v1846 = vld [vmem:[%s2 + $0x530] sm:$0xff]
    %v1847 = vld [vmem:[%s2 + $0x538] sm:$0xff]
    %v1848 = vld [vmem:[%s2 + $0x540] sm:$0xff]
    %v1849 = vld [vmem:[%s2 + $0x548] sm:$0xff]
    %v1850 = vld [vmem:[%s2 + $0x550] sm:$0xff]
    %v1851 = vld [vmem:[%s2 + $0x558] sm:$0xff]
    %v1852 = vld [vmem:[%s2 + $0x560] sm:$0xff]
    %v1853 = vld [vmem:[%s2 + $0x568] sm:$0xff]
    %v1854 = vld [vmem:[%s2 + $0x570] sm:$0xff]
    %v1855 = vld [vmem:[%s2 + $0x578] sm:$0xff]
    %v1856 = vld [vmem:[%s2 + $0x580] sm:$0xff]
    %v1857 = vld [vmem:[%s2 + $0x588] sm:$0xff]
    %v1858 = vld [vmem:[%s2 + $0x590] sm:$0xff]
    %v1859 = vld [vmem:[%s2 + $0x598] sm:$0xff]
    %v1860 = vld [vmem:[%s2 + $0x5a0] sm:$0xff]
    %v1861 = vld [vmem:[%s2 + $0x5a8] sm:$0xff]
    %v1862 = vld [vmem:[%s2 + $0x5b0] sm:$0xff]
    %v1863 = vld [vmem:[%s2 + $0x5b8] sm:$0xff]
    %v1864 = vld [vmem:[%s2 + $0x5c0] sm:$0xff]
    %v1865 = vld [vmem:[%s2 + $0x5c8] sm:$0xff]
    %v1866 = vld [vmem:[%s2 + $0x5d0] sm:$0xff]
    %v1867 = vld [vmem:[%s2 + $0x5d8] sm:$0xff]
    %v1868 = vld [vmem:[%s2 + $0x5e0] sm:$0xff]
    %v1869 = vld [vmem:[%s2 + $0x5e8] sm:$0xff]
    %v1870 = vld [vmem:[%s2 + $0x5f0] sm:$0xff]
    %v1871 = vld [vmem:[%s2 + $0x5f8] sm:$0xff]
    %v1872 = vld [vmem:[%s2 + $0x600] sm:$0xff]
    %v1873 = vld [vmem:[%s2 + $0x608] sm:$0xff]
    %v1874 = vld [vmem:[%s2 + $0x610] sm:$0xff]
    %v1875 = vld [vmem:[%s2 + $0x618] sm:$0xff]
    %v1876 = vld [vmem:[%s2 + $0x620] sm:$0xff]
    %v1877 = vld [vmem:[%s2 + $0x628] sm:$0xff]
    %v1878 = vld [vmem:[%s2 + $0x630] sm:$0xff]
    %v1879 = vld [vmem:[%s2 + $0x638] sm:$0xff]
    %v1880 = vld [vmem:[%s2 + $0x640] sm:$0xff]
    %v1881 = vld [vmem:[%s2 + $0x648] sm:$0xff]
    %v1882 = vld [vmem:[%s2 + $0x650] sm:$0xff]
    %v1883 = vld [vmem:[%s2 + $0x658] sm:$0xff]
    %v1884 = vld [vmem:[%s2 + $0x660] sm:$0xff]
    %v1885 = vld [vmem:[%s2 + $0x668] sm:$0xff]
    %v1886 = vld [vmem:[%s2 + $0x670] sm:$0xff]
    %v1887 = vld [vmem:[%s2 + $0x678] sm:$0xff]
    %v1888 = vld [vmem:[%s2 + $0x680] sm:$0xff]
    %v1889 = vld [vmem:[%s2 + $0x688] sm:$0xff]
    %v1890 = vld [vmem:[%s2 + $0x690] sm:$0xff]
    %v1891 = vld [vmem:[%s2 + $0x698] sm:$0xff]
    %v1892 = vld [vmem:[%s2 + $0x6a0] sm:$0xff]
    %v1893 = vld [vmem:[%s2 + $0x6a8] sm:$0xff]
    %v1894 = vld [vmem:[%s2 + $0x6b0] sm:$0xff]
    %v1895 = vld [vmem:[%s2 + $0x6b8] sm:$0xff]
    %v1896 = vld [vmem:[%s2 + $0x6c0] sm:$0xff]
    %v1897 = vld [vmem:[%s2 + $0x6c8] sm:$0xff]
    %v1898 = vld [vmem:[%s2 + $0x6d0] sm:$0xff]
    %v1899 = vld [vmem:[%s2 + $0x6d8] sm:$0xff]
    %v1900 = vld [vmem:[%s2 + $0x6e0] sm:$0xff]
    %v1901 = vld [vmem:[%s2 + $0x6e8] sm:$0xff]
    %v1902 = vld [vmem:[%s2 + $0x6f0] sm:$0xff]
    %v1903 = vld [vmem:[%s2 + $0x6f8] sm:$0xff]
    %v1904 = vld [vmem:[%s2 + $0x700] sm:$0xff]
    %v1905 = vld [vmem:[%s2 + $0x708] sm:$0xff]
    %v1906 = vld [vmem:[%s2 + $0x710] sm:$0xff]
    %v1907 = vld [vmem:[%s2 + $0x718] sm:$0xff]
    %v1908 = vld [vmem:[%s2 + $0x720] sm:$0xff]
    %v1909 = vld [vmem:[%s2 + $0x728] sm:$0xff]
    %v1910 = vld [vmem:[%s2 + $0x730] sm:$0xff]
    %v1911 = vld [vmem:[%s2 + $0x738] sm:$0xff]
    %v1912 = vld [vmem:[%s2 + $0x740] sm:$0xff]
    %v1913 = vld [vmem:[%s2 + $0x748] sm:$0xff]
    %v1914 = vld [vmem:[%s2 + $0x750] sm:$0xff]
    %v1915 = vld [vmem:[%s2 + $0x758] sm:$0xff]
    %v1916 = vld [vmem:[%s2 + $0x760] sm:$0xff]
    %v1917 = vld [vmem:[%s2 + $0x768] sm:$0xff]
    %v1918 = vld [vmem:[%s2 + $0x770] sm:$0xff]
    %v1919 = vld [vmem:[%s2 + $0x778] sm:$0xff]
    %v1920 = vld [vmem:[%s2 + $0x780] sm:$0xff]
    %v1921 = vld [vmem:[%s2 + $0x788] sm:$0xff]
    %v1922 = vld [vmem:[%s2 + $0x790] sm:$0xff]
    %v1923 = vld [vmem:[%s2 + $0x798] sm:$0xff]
    %v1924 = vld [vmem:[%s2 + $0x7a0] sm:$0xff]
    %v1925 = vld [vmem:[%s2 + $0x7a8] sm:$0xff]
    %v1926 = vld [vmem:[%s2 + $0x7b0] sm:$0xff]
    %v1927 = vld [vmem:[%s2 + $0x7b8] sm:$0xff]
    %v1928 = vld [vmem:[%s2 + $0x7c0] sm:$0xff]
    %v1929 = vld [vmem:[%s2 + $0x7c8] sm:$0xff]
    %v1930 = vld [vmem:[%s2 + $0x7d0] sm:$0xff]
    %v1931 = vld [vmem:[%s2 + $0x7d8] sm:$0xff]
    %v1932 = vld [vmem:[%s2 + $0x7e0] sm:$0xff]
    %v1933 = vld [vmem:[%s2 + $0x7e8] sm:$0xff]
    %v1934 = vld [vmem:[%s2 + $0x7f0] sm:$0xff]
    %v1935 = vld [vmem:[%s2 + $0x7f8] sm:$0xff]
    %v2192 = vunpack.c.l.b16 %v1680
    %v2193 = vunpack.c.h.b16 %v1680
    %v2194 = vunpack.c.l.b16 %v1681
    %v2195 = vunpack.c.h.b16 %v1681
    %v2196 = vunpack.c.l.b16 %v1682
    %v2197 = vunpack.c.h.b16 %v1682
    %v2198 = vunpack.c.l.b16 %v1683
    %v2199 = vunpack.c.h.b16 %v1683
    %v2200 = vunpack.c.l.b16 %v1684
    %v2201 = vunpack.c.h.b16 %v1684
    %v2202 = vunpack.c.l.b16 %v1685
    %v2203 = vunpack.c.h.b16 %v1685
    %v2204 = vunpack.c.l.b16 %v1686
    %v2205 = vunpack.c.h.b16 %v1686
    %v2206 = vunpack.c.l.b16 %v1687
    %v2207 = vunpack.c.h.b16 %v1687
    %v2208 = vunpack.c.l.b16 %v1688
    %v2209 = vunpack.c.h.b16 %v1688
    %v2210 = vunpack.c.l.b16 %v1689
    %v2211 = vunpack.c.h.b16 %v1689
    %v2212 = vunpack.c.l.b16 %v1690
    %v2213 = vunpack.c.h.b16 %v1690
    %v2214 = vunpack.c.l.b16 %v1691
    %v2215 = vunpack.c.h.b16 %v1691
    %v2216 = vunpack.c.l.b16 %v1692
    %v2217 = vunpack.c.h.b16 %v1692
    %v2218 = vunpack.c.l.b16 %v1693
    %v2219 = vunpack.c.h.b16 %v1693
    %v2220 = vunpack.c.l.b16 %v1694
    %v2221 = vunpack.c.h.b16 %v1694
    %v2222 = vunpack.c.l.b16 %v1695
    %v2223 = vunpack.c.h.b16 %v1695
    %v2224 = vunpack.c.l.b16 %v1696
    %v2225 = vunpack.c.h.b16 %v1696
    %v2226 = vunpack.c.l.b16 %v1697
    %v2227 = vunpack.c.h.b16 %v1697
    %v2228 = vunpack.c.l.b16 %v1698
    %v2229 = vunpack.c.h.b16 %v1698
    %v2230 = vunpack.c.l.b16 %v1699
    %v2231 = vunpack.c.h.b16 %v1699
    %v2232 = vunpack.c.l.b16 %v1700
    %v2233 = vunpack.c.h.b16 %v1700
    %v2234 = vunpack.c.l.b16 %v1701
    %v2235 = vunpack.c.h.b16 %v1701
    %v2236 = vunpack.c.l.b16 %v1702
    %v2237 = vunpack.c.h.b16 %v1702
    %v2238 = vunpack.c.l.b16 %v1703
    %v2239 = vunpack.c.h.b16 %v1703
    %v2240 = vunpack.c.l.b16 %v1704
    %v2241 = vunpack.c.h.b16 %v1704
    %v2242 = vunpack.c.l.b16 %v1705
    %v2243 = vunpack.c.h.b16 %v1705
    %v2244 = vunpack.c.l.b16 %v1706
    %v2245 = vunpack.c.h.b16 %v1706
    %v2246 = vunpack.c.l.b16 %v1707
    %v2247 = vunpack.c.h.b16 %v1707
    %v2248 = vunpack.c.l.b16 %v1708
    %v2249 = vunpack.c.h.b16 %v1708
    %v2250 = vunpack.c.l.b16 %v1709
    %v2251 = vunpack.c.h.b16 %v1709
    %v2252 = vunpack.c.l.b16 %v1710
    %v2253 = vunpack.c.h.b16 %v1710
    %v2254 = vunpack.c.l.b16 %v1711
    %v2255 = vunpack.c.h.b16 %v1711
    %v2256 = vunpack.c.l.b16 %v1712
    %v2257 = vunpack.c.h.b16 %v1712
    %v2258 = vunpack.c.l.b16 %v1713
    %v2259 = vunpack.c.h.b16 %v1713
    %v2260 = vunpack.c.l.b16 %v1714
    %v2261 = vunpack.c.h.b16 %v1714
    %v2262 = vunpack.c.l.b16 %v1715
    %v2263 = vunpack.c.h.b16 %v1715
    %v2264 = vunpack.c.l.b16 %v1716
    %v2265 = vunpack.c.h.b16 %v1716
    %v2266 = vunpack.c.l.b16 %v1717
    %v2267 = vunpack.c.h.b16 %v1717
    %v2268 = vunpack.c.l.b16 %v1718
    %v2269 = vunpack.c.h.b16 %v1718
    %v2270 = vunpack.c.l.b16 %v1719
    %v2271 = vunpack.c.h.b16 %v1719
    %v2272 = vunpack.c.l.b16 %v1720
    %v2273 = vunpack.c.h.b16 %v1720
    %v2274 = vunpack.c.l.b16 %v1721
    %v2275 = vunpack.c.h.b16 %v1721
    %v2276 = vunpack.c.l.b16 %v1722
    %v2277 = vunpack.c.h.b16 %v1722
    %v2278 = vunpack.c.l.b16 %v1723
    %v2279 = vunpack.c.h.b16 %v1723
    %v2280 = vunpack.c.l.b16 %v1724
    %v2281 = vunpack.c.h.b16 %v1724
    %v2282 = vunpack.c.l.b16 %v1725
    %v2283 = vunpack.c.h.b16 %v1725
    %v2284 = vunpack.c.l.b16 %v1726
    %v2285 = vunpack.c.h.b16 %v1726
    %v2286 = vunpack.c.l.b16 %v1727
    %v2287 = vunpack.c.h.b16 %v1727
    %v2288 = vunpack.c.l.b16 %v1728
    %v2289 = vunpack.c.h.b16 %v1728
    %v2290 = vunpack.c.l.b16 %v1729
    %v2291 = vunpack.c.h.b16 %v1729
    %v2292 = vunpack.c.l.b16 %v1730
    %v2293 = vunpack.c.h.b16 %v1730
    %v2294 = vunpack.c.l.b16 %v1731
    %v2295 = vunpack.c.h.b16 %v1731
    %v2296 = vunpack.c.l.b16 %v1732
    %v2297 = vunpack.c.h.b16 %v1732
    %v2298 = vunpack.c.l.b16 %v1733
    %v2299 = vunpack.c.h.b16 %v1733
    %v2300 = vunpack.c.l.b16 %v1734
    %v2301 = vunpack.c.h.b16 %v1734
    %v2302 = vunpack.c.l.b16 %v1735
    %v2303 = vunpack.c.h.b16 %v1735
    %v2304 = vunpack.c.l.b16 %v1736
    %v2305 = vunpack.c.h.b16 %v1736
    %v2306 = vunpack.c.l.b16 %v1737
    %v2307 = vunpack.c.h.b16 %v1737
    %v2308 = vunpack.c.l.b16 %v1738
    %v2309 = vunpack.c.h.b16 %v1738
    %v2310 = vunpack.c.l.b16 %v1739
    %v2311 = vunpack.c.h.b16 %v1739
    %v2312 = vunpack.c.l.b16 %v1740
    %v2313 = vunpack.c.h.b16 %v1740
    %v2314 = vunpack.c.l.b16 %v1741
    %v2315 = vunpack.c.h.b16 %v1741
    %v2316 = vunpack.c.l.b16 %v1742
    %v2317 = vunpack.c.h.b16 %v1742
    %v2318 = vunpack.c.l.b16 %v1743
    %v2319 = vunpack.c.h.b16 %v1743
    %v2320 = vunpack.c.l.b16 %v1744
    %v2321 = vunpack.c.h.b16 %v1744
    %v2322 = vunpack.c.l.b16 %v1745
    %v2323 = vunpack.c.h.b16 %v1745
    %v2324 = vunpack.c.l.b16 %v1746
    %v2325 = vunpack.c.h.b16 %v1746
    %v2326 = vunpack.c.l.b16 %v1747
    %v2327 = vunpack.c.h.b16 %v1747
    %v2328 = vunpack.c.l.b16 %v1748
    %v2329 = vunpack.c.h.b16 %v1748
    %v2330 = vunpack.c.l.b16 %v1749
    %v2331 = vunpack.c.h.b16 %v1749
    %v2332 = vunpack.c.l.b16 %v1750
    %v2333 = vunpack.c.h.b16 %v1750
    %v2334 = vunpack.c.l.b16 %v1751
    %v2335 = vunpack.c.h.b16 %v1751
    %v2336 = vunpack.c.l.b16 %v1752
    %v2337 = vunpack.c.h.b16 %v1752
    %v2338 = vunpack.c.l.b16 %v1753
    %v2339 = vunpack.c.h.b16 %v1753
    %v2340 = vunpack.c.l.b16 %v1754
    %v2341 = vunpack.c.h.b16 %v1754
    %v2342 = vunpack.c.l.b16 %v1755
    %v2343 = vunpack.c.h.b16 %v1755
    %v2344 = vunpack.c.l.b16 %v1756
    %v2345 = vunpack.c.h.b16 %v1756
    %v2346 = vunpack.c.l.b16 %v1757
    %v2347 = vunpack.c.h.b16 %v1757
    %v2348 = vunpack.c.l.b16 %v1758
    %v2349 = vunpack.c.h.b16 %v1758
    %v2350 = vunpack.c.l.b16 %v1759
    %v2351 = vunpack.c.h.b16 %v1759
    %v2352 = vunpack.c.l.b16 %v1760
    %v2353 = vunpack.c.h.b16 %v1760
    %v2354 = vunpack.c.l.b16 %v1761
    %v2355 = vunpack.c.h.b16 %v1761
    %v2356 = vunpack.c.l.b16 %v1762
    %v2357 = vunpack.c.h.b16 %v1762
    %v2358 = vunpack.c.l.b16 %v1763
    %v2359 = vunpack.c.h.b16 %v1763
    %v2360 = vunpack.c.l.b16 %v1764
    %v2361 = vunpack.c.h.b16 %v1764
    %v2362 = vunpack.c.l.b16 %v1765
    %v2363 = vunpack.c.h.b16 %v1765
    %v2364 = vunpack.c.l.b16 %v1766
    %v2365 = vunpack.c.h.b16 %v1766
    %v2366 = vunpack.c.l.b16 %v1767
    %v2367 = vunpack.c.h.b16 %v1767
    %v2368 = vunpack.c.l.b16 %v1768
    %v2369 = vunpack.c.h.b16 %v1768
    %v2370 = vunpack.c.l.b16 %v1769
    %v2371 = vunpack.c.h.b16 %v1769
    %v2372 = vunpack.c.l.b16 %v1770
    %v2373 = vunpack.c.h.b16 %v1770
    %v2374 = vunpack.c.l.b16 %v1771
    %v2375 = vunpack.c.h.b16 %v1771
    %v2376 = vunpack.c.l.b16 %v1772
    %v2377 = vunpack.c.h.b16 %v1772
    %v2378 = vunpack.c.l.b16 %v1773
    %v2379 = vunpack.c.h.b16 %v1773
    %v2380 = vunpack.c.l.b16 %v1774
    %v2381 = vunpack.c.h.b16 %v1774
    %v2382 = vunpack.c.l.b16 %v1775
    %v2383 = vunpack.c.h.b16 %v1775
    %v2384 = vunpack.c.l.b16 %v1776
    %v2385 = vunpack.c.h.b16 %v1776
    %v2386 = vunpack.c.l.b16 %v1777
    %v2387 = vunpack.c.h.b16 %v1777
    %v2388 = vunpack.c.l.b16 %v1778
    %v2389 = vunpack.c.h.b16 %v1778
    %v2390 = vunpack.c.l.b16 %v1779
    %v2391 = vunpack.c.h.b16 %v1779
    %v2392 = vunpack.c.l.b16 %v1780
    %v2393 = vunpack.c.h.b16 %v1780
    %v2394 = vunpack.c.l.b16 %v1781
    %v2395 = vunpack.c.h.b16 %v1781
    %v2396 = vunpack.c.l.b16 %v1782
    %v2397 = vunpack.c.h.b16 %v1782
    %v2398 = vunpack.c.l.b16 %v1783
    %v2399 = vunpack.c.h.b16 %v1783
    %v2400 = vunpack.c.l.b16 %v1784
    %v2401 = vunpack.c.h.b16 %v1784
    %v2402 = vunpack.c.l.b16 %v1785
    %v2403 = vunpack.c.h.b16 %v1785
    %v2404 = vunpack.c.l.b16 %v1786
    %v2405 = vunpack.c.h.b16 %v1786
    %v2406 = vunpack.c.l.b16 %v1787
    %v2407 = vunpack.c.h.b16 %v1787
    %v2408 = vunpack.c.l.b16 %v1788
    %v2409 = vunpack.c.h.b16 %v1788
    %v2410 = vunpack.c.l.b16 %v1789
    %v2411 = vunpack.c.h.b16 %v1789
    %v2412 = vunpack.c.l.b16 %v1790
    %v2413 = vunpack.c.h.b16 %v1790
    %v2414 = vunpack.c.l.b16 %v1791
    %v2415 = vunpack.c.h.b16 %v1791
    %v2416 = vunpack.c.l.b16 %v1792
    %v2417 = vunpack.c.h.b16 %v1792
    %v2418 = vunpack.c.l.b16 %v1793
    %v2419 = vunpack.c.h.b16 %v1793
    %v2420 = vunpack.c.l.b16 %v1794
    %v2421 = vunpack.c.h.b16 %v1794
    %v2422 = vunpack.c.l.b16 %v1795
    %v2423 = vunpack.c.h.b16 %v1795
    %v2424 = vunpack.c.l.b16 %v1796
    %v2425 = vunpack.c.h.b16 %v1796
    %v2426 = vunpack.c.l.b16 %v1797
    %v2427 = vunpack.c.h.b16 %v1797
    %v2428 = vunpack.c.l.b16 %v1798
    %v2429 = vunpack.c.h.b16 %v1798
    %v2430 = vunpack.c.l.b16 %v1799
    %v2431 = vunpack.c.h.b16 %v1799
    %v2432 = vunpack.c.l.b16 %v1800
    %v2433 = vunpack.c.h.b16 %v1800
    %v2434 = vunpack.c.l.b16 %v1801
    %v2435 = vunpack.c.h.b16 %v1801
    %v2436 = vunpack.c.l.b16 %v1802
    %v2437 = vunpack.c.h.b16 %v1802
    %v2438 = vunpack.c.l.b16 %v1803
    %v2439 = vunpack.c.h.b16 %v1803
    %v2440 = vunpack.c.l.b16 %v1804
    %v2441 = vunpack.c.h.b16 %v1804
    %v2442 = vunpack.c.l.b16 %v1805
    %v2443 = vunpack.c.h.b16 %v1805
    %v2444 = vunpack.c.l.b16 %v1806
    %v2445 = vunpack.c.h.b16 %v1806
    %v2446 = vunpack.c.l.b16 %v1807
    %v2447 = vunpack.c.h.b16 %v1807
    %v2448 = vunpack.c.l.b16 %v1808
    %v2449 = vunpack.c.h.b16 %v1808
    %v2450 = vunpack.c.l.b16 %v1809
    %v2451 = vunpack.c.h.b16 %v1809
    %v2452 = vunpack.c.l.b16 %v1810
    %v2453 = vunpack.c.h.b16 %v1810
    %v2454 = vunpack.c.l.b16 %v1811
    %v2455 = vunpack.c.h.b16 %v1811
    %v2456 = vunpack.c.l.b16 %v1812
    %v2457 = vunpack.c.h.b16 %v1812
    %v2458 = vunpack.c.l.b16 %v1813
    %v2459 = vunpack.c.h.b16 %v1813
    %v2460 = vunpack.c.l.b16 %v1814
    %v2461 = vunpack.c.h.b16 %v1814
    %v2462 = vunpack.c.l.b16 %v1815
    %v2463 = vunpack.c.h.b16 %v1815
    %v2464 = vunpack.c.l.b16 %v1816
    %v2465 = vunpack.c.h.b16 %v1816
    %v2466 = vunpack.c.l.b16 %v1817
    %v2467 = vunpack.c.h.b16 %v1817
    %v2468 = vunpack.c.l.b16 %v1818
    %v2469 = vunpack.c.h.b16 %v1818
    %v2470 = vunpack.c.l.b16 %v1819
    %v2471 = vunpack.c.h.b16 %v1819
    %v2472 = vunpack.c.l.b16 %v1820
    %v2473 = vunpack.c.h.b16 %v1820
    %v2474 = vunpack.c.l.b16 %v1821
    %v2475 = vunpack.c.h.b16 %v1821
    %v2476 = vunpack.c.l.b16 %v1822
    %v2477 = vunpack.c.h.b16 %v1822
    %v2478 = vunpack.c.l.b16 %v1823
    %v2479 = vunpack.c.h.b16 %v1823
    %v2480 = vunpack.c.l.b16 %v1824
    %v2481 = vunpack.c.h.b16 %v1824
    %v2482 = vunpack.c.l.b16 %v1825
    %v2483 = vunpack.c.h.b16 %v1825
    %v2484 = vunpack.c.l.b16 %v1826
    %v2485 = vunpack.c.h.b16 %v1826
    %v2486 = vunpack.c.l.b16 %v1827
    %v2487 = vunpack.c.h.b16 %v1827
    %v2488 = vunpack.c.l.b16 %v1828
    %v2489 = vunpack.c.h.b16 %v1828
    %v2490 = vunpack.c.l.b16 %v1829
    %v2491 = vunpack.c.h.b16 %v1829
    %v2492 = vunpack.c.l.b16 %v1830
    %v2493 = vunpack.c.h.b16 %v1830
    %v2494 = vunpack.c.l.b16 %v1831
    %v2495 = vunpack.c.h.b16 %v1831
    %v2496 = vunpack.c.l.b16 %v1832
    %v2497 = vunpack.c.h.b16 %v1832
    %v2498 = vunpack.c.l.b16 %v1833
    %v2499 = vunpack.c.h.b16 %v1833
    %v2500 = vunpack.c.l.b16 %v1834
    %v2501 = vunpack.c.h.b16 %v1834
    %v2502 = vunpack.c.l.b16 %v1835
    %v2503 = vunpack.c.h.b16 %v1835
    %v2504 = vunpack.c.l.b16 %v1836
    %v2505 = vunpack.c.h.b16 %v1836
    %v2506 = vunpack.c.l.b16 %v1837
    %v2507 = vunpack.c.h.b16 %v1837
    %v2508 = vunpack.c.l.b16 %v1838
    %v2509 = vunpack.c.h.b16 %v1838
    %v2510 = vunpack.c.l.b16 %v1839
    %v2511 = vunpack.c.h.b16 %v1839
    %v2512 = vunpack.c.l.b16 %v1840
    %v2513 = vunpack.c.h.b16 %v1840
    %v2514 = vunpack.c.l.b16 %v1841
    %v2515 = vunpack.c.h.b16 %v1841
    %v2516 = vunpack.c.l.b16 %v1842
    %v2517 = vunpack.c.h.b16 %v1842
    %v2518 = vunpack.c.l.b16 %v1843
    %v2519 = vunpack.c.h.b16 %v1843
    %v2520 = vunpack.c.l.b16 %v1844
    %v2521 = vunpack.c.h.b16 %v1844
    %v2522 = vunpack.c.l.b16 %v1845
    %v2523 = vunpack.c.h.b16 %v1845
    %v2524 = vunpack.c.l.b16 %v1846
    %v2525 = vunpack.c.h.b16 %v1846
    %v2526 = vunpack.c.l.b16 %v1847
    %v2527 = vunpack.c.h.b16 %v1847
    %v2528 = vunpack.c.l.b16 %v1848
    %v2529 = vunpack.c.h.b16 %v1848
    %v2530 = vunpack.c.l.b16 %v1849
    %v2531 = vunpack.c.h.b16 %v1849
    %v2532 = vunpack.c.l.b16 %v1850
    %v2533 = vunpack.c.h.b16 %v1850
    %v2534 = vunpack.c.l.b16 %v1851
    %v2535 = vunpack.c.h.b16 %v1851
    %v2536 = vunpack.c.l.b16 %v1852
    %v2537 = vunpack.c.h.b16 %v1852
    %v2538 = vunpack.c.l.b16 %v1853
    %v2539 = vunpack.c.h.b16 %v1853
    %v2540 = vunpack.c.l.b16 %v1854
    %v2541 = vunpack.c.h.b16 %v1854
    %v2542 = vunpack.c.l.b16 %v1855
    %v2543 = vunpack.c.h.b16 %v1855
    %v2544 = vunpack.c.l.b16 %v1856
    %v2545 = vunpack.c.h.b16 %v1856
    %v2546 = vunpack.c.l.b16 %v1857
    %v2547 = vunpack.c.h.b16 %v1857
    %v2548 = vunpack.c.l.b16 %v1858
    %v2549 = vunpack.c.h.b16 %v1858
    %v2550 = vunpack.c.l.b16 %v1859
    %v2551 = vunpack.c.h.b16 %v1859
    %v2552 = vunpack.c.l.b16 %v1860
    %v2553 = vunpack.c.h.b16 %v1860
    %v2554 = vunpack.c.l.b16 %v1861
    %v2555 = vunpack.c.h.b16 %v1861
    %v2556 = vunpack.c.l.b16 %v1862
    %v2557 = vunpack.c.h.b16 %v1862
    %v2558 = vunpack.c.l.b16 %v1863
    %v2559 = vunpack.c.h.b16 %v1863
    %v2560 = vunpack.c.l.b16 %v1864
    %v2561 = vunpack.c.h.b16 %v1864
    %v2562 = vunpack.c.l.b16 %v1865
    %v2563 = vunpack.c.h.b16 %v1865
    %v2564 = vunpack.c.l.b16 %v1866
    %v2565 = vunpack.c.h.b16 %v1866
    %v2566 = vunpack.c.l.b16 %v1867
    %v2567 = vunpack.c.h.b16 %v1867
    %v2568 = vunpack.c.l.b16 %v1868
    %v2569 = vunpack.c.h.b16 %v1868
    %v2570 = vunpack.c.l.b16 %v1869
    %v2571 = vunpack.c.h.b16 %v1869
    %v2572 = vunpack.c.l.b16 %v1870
    %v2573 = vunpack.c.h.b16 %v1870
    %v2574 = vunpack.c.l.b16 %v1871
    %v2575 = vunpack.c.h.b16 %v1871
    %v2576 = vunpack.c.l.b16 %v1872
    %v2577 = vunpack.c.h.b16 %v1872
    %v2578 = vunpack.c.l.b16 %v1873
    %v2579 = vunpack.c.h.b16 %v1873
    %v2580 = vunpack.c.l.b16 %v1874
    %v2581 = vunpack.c.h.b16 %v1874
    %v2582 = vunpack.c.l.b16 %v1875
    %v2583 = vunpack.c.h.b16 %v1875
    %v2584 = vunpack.c.l.b16 %v1876
    %v2585 = vunpack.c.h.b16 %v1876
    %v2586 = vunpack.c.l.b16 %v1877
    %v2587 = vunpack.c.h.b16 %v1877
    %v2588 = vunpack.c.l.b16 %v1878
    %v2589 = vunpack.c.h.b16 %v1878
    %v2590 = vunpack.c.l.b16 %v1879
    %v2591 = vunpack.c.h.b16 %v1879
    %v2592 = vunpack.c.l.b16 %v1880
    %v2593 = vunpack.c.h.b16 %v1880
    %v2594 = vunpack.c.l.b16 %v1881
    %v2595 = vunpack.c.h.b16 %v1881
    %v2596 = vunpack.c.l.b16 %v1882
    %v2597 = vunpack.c.h.b16 %v1882
    %v2598 = vunpack.c.l.b16 %v1883
    %v2599 = vunpack.c.h.b16 %v1883
    %v2600 = vunpack.c.l.b16 %v1884
    %v2601 = vunpack.c.h.b16 %v1884
    %v2602 = vunpack.c.l.b16 %v1885
    %v2603 = vunpack.c.h.b16 %v1885
    %v2604 = vunpack.c.l.b16 %v1886
    %v2605 = vunpack.c.h.b16 %v1886
    %v2606 = vunpack.c.l.b16 %v1887
    %v2607 = vunpack.c.h.b16 %v1887
    %v2608 = vunpack.c.l.b16 %v1888
    %v2609 = vunpack.c.h.b16 %v1888
    %v2610 = vunpack.c.l.b16 %v1889
    %v2611 = vunpack.c.h.b16 %v1889
    %v2612 = vunpack.c.l.b16 %v1890
    %v2613 = vunpack.c.h.b16 %v1890
    %v2614 = vunpack.c.l.b16 %v1891
    %v2615 = vunpack.c.h.b16 %v1891
    %v2616 = vunpack.c.l.b16 %v1892
    %v2617 = vunpack.c.h.b16 %v1892
    %v2618 = vunpack.c.l.b16 %v1893
    %v2619 = vunpack.c.h.b16 %v1893
    %v2620 = vunpack.c.l.b16 %v1894
    %v2621 = vunpack.c.h.b16 %v1894
    %v2622 = vunpack.c.l.b16 %v1895
    %v2623 = vunpack.c.h.b16 %v1895
    %v2624 = vunpack.c.l.b16 %v1896
    %v2625 = vunpack.c.h.b16 %v1896
    %v2626 = vunpack.c.l.b16 %v1897
    %v2627 = vunpack.c.h.b16 %v1897
    %v2628 = vunpack.c.l.b16 %v1898
    %v2629 = vunpack.c.h.b16 %v1898
    %v2630 = vunpack.c.l.b16 %v1899
    %v2631 = vunpack.c.h.b16 %v1899
    %v2632 = vunpack.c.l.b16 %v1900
    %v2633 = vunpack.c.h.b16 %v1900
    %v2634 = vunpack.c.l.b16 %v1901
    %v2635 = vunpack.c.h.b16 %v1901
    %v2636 = vunpack.c.l.b16 %v1902
    %v2637 = vunpack.c.h.b16 %v1902
    %v2638 = vunpack.c.l.b16 %v1903
    %v2639 = vunpack.c.h.b16 %v1903
    %v2640 = vunpack.c.l.b16 %v1904
    %v2641 = vunpack.c.h.b16 %v1904
    %v2642 = vunpack.c.l.b16 %v1905
    %v2643 = vunpack.c.h.b16 %v1905
    %v2644 = vunpack.c.l.b16 %v1906
    %v2645 = vunpack.c.h.b16 %v1906
    %v2646 = vunpack.c.l.b16 %v1907
    %v2647 = vunpack.c.h.b16 %v1907
    %v2648 = vunpack.c.l.b16 %v1908
    %v2649 = vunpack.c.h.b16 %v1908
    %v2650 = vunpack.c.l.b16 %v1909
    %v2651 = vunpack.c.h.b16 %v1909
    %v2652 = vunpack.c.l.b16 %v1910
    %v2653 = vunpack.c.h.b16 %v1910
    %v2654 = vunpack.c.l.b16 %v1911
    %v2655 = vunpack.c.h.b16 %v1911
    %v2656 = vunpack.c.l.b16 %v1912
    %v2657 = vunpack.c.h.b16 %v1912
    %v2658 = vunpack.c.l.b16 %v1913
    %v2659 = vunpack.c.h.b16 %v1913
    %v2660 = vunpack.c.l.b16 %v1914
    %v2661 = vunpack.c.h.b16 %v1914
    %v2662 = vunpack.c.l.b16 %v1915
    %v2663 = vunpack.c.h.b16 %v1915
    %v2664 = vunpack.c.l.b16 %v1916
    %v2665 = vunpack.c.h.b16 %v1916
    %v2666 = vunpack.c.l.b16 %v1917
    %v2667 = vunpack.c.h.b16 %v1917
    %v2668 = vunpack.c.l.b16 %v1918
    %v2669 = vunpack.c.h.b16 %v1918
    %v2670 = vunpack.c.l.b16 %v1919
    %v2671 = vunpack.c.h.b16 %v1919
    %v2672 = vunpack.c.l.b16 %v1920
    %v2673 = vunpack.c.h.b16 %v1920
    %v2674 = vunpack.c.l.b16 %v1921
    %v2675 = vunpack.c.h.b16 %v1921
    %v2676 = vunpack.c.l.b16 %v1922
    %v2677 = vunpack.c.h.b16 %v1922
    %v2678 = vunpack.c.l.b16 %v1923
    %v2679 = vunpack.c.h.b16 %v1923
    %v2680 = vunpack.c.l.b16 %v1924
    %v2681 = vunpack.c.h.b16 %v1924
    %v2682 = vunpack.c.l.b16 %v1925
    %v2683 = vunpack.c.h.b16 %v1925
    %v2684 = vunpack.c.l.b16 %v1926
    %v2685 = vunpack.c.h.b16 %v1926
    %v2686 = vunpack.c.l.b16 %v1927
    %v2687 = vunpack.c.h.b16 %v1927
    %v2688 = vunpack.c.l.b16 %v1928
    %v2689 = vunpack.c.h.b16 %v1928
    %v2690 = vunpack.c.l.b16 %v1929
    %v2691 = vunpack.c.h.b16 %v1929
    %v2692 = vunpack.c.l.b16 %v1930
    %v2693 = vunpack.c.h.b16 %v1930
    %v2694 = vunpack.c.l.b16 %v1931
    %v2695 = vunpack.c.h.b16 %v1931
    %v2696 = vunpack.c.l.b16 %v1932
    %v2697 = vunpack.c.h.b16 %v1932
    %v2698 = vunpack.c.l.b16 %v1933
    %v2699 = vunpack.c.h.b16 %v1933
    %v2700 = vunpack.c.l.b16 %v1934
    %v2701 = vunpack.c.h.b16 %v1934
    %v2702 = vunpack.c.l.b16 %v1935
    %v2703 = vunpack.c.h.b16 %v1935
    %v2704 = vpack.c.b16 %v2194, %v2192
    %v2705 = vpack.c.b16 %v2195, %v2193
    %v2706 = vpack.c.b16 %v2198, %v2196
    %v2707 = vpack.c.b16 %v2199, %v2197
    %v2708 = vpack.c.b16 %v2202, %v2200
    %v2709 = vpack.c.b16 %v2203, %v2201
    %v2710 = vpack.c.b16 %v2206, %v2204
    %v2711 = vpack.c.b16 %v2207, %v2205
    %v2712 = vpack.c.b16 %v2210, %v2208
    %v2713 = vpack.c.b16 %v2211, %v2209
    %v2714 = vpack.c.b16 %v2214, %v2212
    %v2715 = vpack.c.b16 %v2215, %v2213
    %v2716 = vpack.c.b16 %v2218, %v2216
    %v2717 = vpack.c.b16 %v2219, %v2217
    %v2718 = vpack.c.b16 %v2222, %v2220
    %v2719 = vpack.c.b16 %v2223, %v2221
    %v2720 = vpack.c.b16 %v2226, %v2224
    %v2721 = vpack.c.b16 %v2227, %v2225
    %v2722 = vpack.c.b16 %v2230, %v2228
    %v2723 = vpack.c.b16 %v2231, %v2229
    %v2724 = vpack.c.b16 %v2234, %v2232
    %v2725 = vpack.c.b16 %v2235, %v2233
    %v2726 = vpack.c.b16 %v2238, %v2236
    %v2727 = vpack.c.b16 %v2239, %v2237
    %v2728 = vpack.c.b16 %v2242, %v2240
    %v2729 = vpack.c.b16 %v2243, %v2241
    %v2730 = vpack.c.b16 %v2246, %v2244
    %v2731 = vpack.c.b16 %v2247, %v2245
    %v2732 = vpack.c.b16 %v2250, %v2248
    %v2733 = vpack.c.b16 %v2251, %v2249
    %v2734 = vpack.c.b16 %v2254, %v2252
    %v2735 = vpack.c.b16 %v2255, %v2253
    %v2736 = vpack.c.b16 %v2258, %v2256
    %v2737 = vpack.c.b16 %v2259, %v2257
    %v2738 = vpack.c.b16 %v2262, %v2260
    %v2739 = vpack.c.b16 %v2263, %v2261
    %v2740 = vpack.c.b16 %v2266, %v2264
    %v2741 = vpack.c.b16 %v2267, %v2265
    %v2742 = vpack.c.b16 %v2270, %v2268
    %v2743 = vpack.c.b16 %v2271, %v2269
    %v2744 = vpack.c.b16 %v2274, %v2272
    %v2745 = vpack.c.b16 %v2275, %v2273
    %v2746 = vpack.c.b16 %v2278, %v2276
    %v2747 = vpack.c.b16 %v2279, %v2277
    %v2748 = vpack.c.b16 %v2282, %v2280
    %v2749 = vpack.c.b16 %v2283, %v2281
    %v2750 = vpack.c.b16 %v2286, %v2284
    %v2751 = vpack.c.b16 %v2287, %v2285
    %v2752 = vpack.c.b16 %v2290, %v2288
    %v2753 = vpack.c.b16 %v2291, %v2289
    %v2754 = vpack.c.b16 %v2294, %v2292
    %v2755 = vpack.c.b16 %v2295, %v2293
    %v2756 = vpack.c.b16 %v2298, %v2296
    %v2757 = vpack.c.b16 %v2299, %v2297
    %v2758 = vpack.c.b16 %v2302, %v2300
    %v2759 = vpack.c.b16 %v2303, %v2301
    %v2760 = vpack.c.b16 %v2306, %v2304
    %v2761 = vpack.c.b16 %v2307, %v2305
    %v2762 = vpack.c.b16 %v2310, %v2308
    %v2763 = vpack.c.b16 %v2311, %v2309
    %v2764 = vpack.c.b16 %v2314, %v2312
    %v2765 = vpack.c.b16 %v2315, %v2313
    %v2766 = vpack.c.b16 %v2318, %v2316
    %v2767 = vpack.c.b16 %v2319, %v2317
    %v2768 = vpack.c.b16 %v2322, %v2320
    %v2769 = vpack.c.b16 %v2323, %v2321
    %v2770 = vpack.c.b16 %v2326, %v2324
    %v2771 = vpack.c.b16 %v2327, %v2325
    %v2772 = vpack.c.b16 %v2330, %v2328
    %v2773 = vpack.c.b16 %v2331, %v2329
    %v2774 = vpack.c.b16 %v2334, %v2332
    %v2775 = vpack.c.b16 %v2335, %v2333
    %v2776 = vpack.c.b16 %v2338, %v2336
    %v2777 = vpack.c.b16 %v2339, %v2337
    %v2778 = vpack.c.b16 %v2342, %v2340
    %v2779 = vpack.c.b16 %v2343, %v2341
    %v2780 = vpack.c.b16 %v2346, %v2344
    %v2781 = vpack.c.b16 %v2347, %v2345
    %v2782 = vpack.c.b16 %v2350, %v2348
    %v2783 = vpack.c.b16 %v2351, %v2349
    %v2784 = vpack.c.b16 %v2354, %v2352
    %v2785 = vpack.c.b16 %v2355, %v2353
    %v2786 = vpack.c.b16 %v2358, %v2356
    %v2787 = vpack.c.b16 %v2359, %v2357
    %v2788 = vpack.c.b16 %v2362, %v2360
    %v2789 = vpack.c.b16 %v2363, %v2361
    %v2790 = vpack.c.b16 %v2366, %v2364
    %v2791 = vpack.c.b16 %v2367, %v2365
    %v2792 = vpack.c.b16 %v2370, %v2368
    %v2793 = vpack.c.b16 %v2371, %v2369
    %v2794 = vpack.c.b16 %v2374, %v2372
    %v2795 = vpack.c.b16 %v2375, %v2373
    %v2796 = vpack.c.b16 %v2378, %v2376
    %v2797 = vpack.c.b16 %v2379, %v2377
    %v2798 = vpack.c.b16 %v2382, %v2380
    %v2799 = vpack.c.b16 %v2383, %v2381
    %v2800 = vpack.c.b16 %v2386, %v2384
    %v2801 = vpack.c.b16 %v2387, %v2385
    %v2802 = vpack.c.b16 %v2390, %v2388
    %v2803 = vpack.c.b16 %v2391, %v2389
    %v2804 = vpack.c.b16 %v2394, %v2392
    %v2805 = vpack.c.b16 %v2395, %v2393
    %v2806 = vpack.c.b16 %v2398, %v2396
    %v2807 = vpack.c.b16 %v2399, %v2397
    %v2808 = vpack.c.b16 %v2402, %v2400
    %v2809 = vpack.c.b16 %v2403, %v2401
    %v2810 = vpack.c.b16 %v2406, %v2404
    %v2811 = vpack.c.b16 %v2407, %v2405
    %v2812 = vpack.c.b16 %v2410, %v2408
    %v2813 = vpack.c.b16 %v2411, %v2409
    %v2814 = vpack.c.b16 %v2414, %v2412
    %v2815 = vpack.c.b16 %v2415, %v2413
    %v2816 = vpack.c.b16 %v2418, %v2416
    %v2817 = vpack.c.b16 %v2419, %v2417
    %v2818 = vpack.c.b16 %v2422, %v2420
    %v2819 = vpack.c.b16 %v2423, %v2421
    %v2820 = vpack.c.b16 %v2426, %v2424
    %v2821 = vpack.c.b16 %v2427, %v2425
    %v2822 = vpack.c.b16 %v2430, %v2428
    %v2823 = vpack.c.b16 %v2431, %v2429
    %v2824 = vpack.c.b16 %v2434, %v2432
    %v2825 = vpack.c.b16 %v2435, %v2433
    %v2826 = vpack.c.b16 %v2438, %v2436
    %v2827 = vpack.c.b16 %v2439, %v2437
    %v2828 = vpack.c.b16 %v2442, %v2440
    %v2829 = vpack.c.b16 %v2443, %v2441
    %v2830 = vpack.c.b16 %v2446, %v2444
    %v2831 = vpack.c.b16 %v2447, %v2445
    %v2832 = vpack.c.b16 %v2450, %v2448
    %v2833 = vpack.c.b16 %v2451, %v2449
    %v2834 = vpack.c.b16 %v2454, %v2452
    %v2835 = vpack.c.b16 %v2455, %v2453
    %v2836 = vpack.c.b16 %v2458, %v2456
    %v2837 = vpack.c.b16 %v2459, %v2457
    %v2838 = vpack.c.b16 %v2462, %v2460
    %v2839 = vpack.c.b16 %v2463, %v2461
    %v2840 = vpack.c.b16 %v2466, %v2464
    %v2841 = vpack.c.b16 %v2467, %v2465
    %v2842 = vpack.c.b16 %v2470, %v2468
    %v2843 = vpack.c.b16 %v2471, %v2469
    %v2844 = vpack.c.b16 %v2474, %v2472
    %v2845 = vpack.c.b16 %v2475, %v2473
    %v2846 = vpack.c.b16 %v2478, %v2476
    %v2847 = vpack.c.b16 %v2479, %v2477
    %v2848 = vpack.c.b16 %v2482, %v2480
    %v2849 = vpack.c.b16 %v2483, %v2481
    %v2850 = vpack.c.b16 %v2486, %v2484
    %v2851 = vpack.c.b16 %v2487, %v2485
    %v2852 = vpack.c.b16 %v2490, %v2488
    %v2853 = vpack.c.b16 %v2491, %v2489
    %v2854 = vpack.c.b16 %v2494, %v2492
    %v2855 = vpack.c.b16 %v2495, %v2493
    %v2856 = vpack.c.b16 %v2498, %v2496
    %v2857 = vpack.c.b16 %v2499, %v2497
    %v2858 = vpack.c.b16 %v2502, %v2500
    %v2859 = vpack.c.b16 %v2503, %v2501
    %v2860 = vpack.c.b16 %v2506, %v2504
    %v2861 = vpack.c.b16 %v2507, %v2505
    %v2862 = vpack.c.b16 %v2510, %v2508
    %v2863 = vpack.c.b16 %v2511, %v2509
    %v2864 = vpack.c.b16 %v2514, %v2512
    %v2865 = vpack.c.b16 %v2515, %v2513
    %v2866 = vpack.c.b16 %v2518, %v2516
    %v2867 = vpack.c.b16 %v2519, %v2517
    %v2868 = vpack.c.b16 %v2522, %v2520
    %v2869 = vpack.c.b16 %v2523, %v2521
    %v2870 = vpack.c.b16 %v2526, %v2524
    %v2871 = vpack.c.b16 %v2527, %v2525
    %v2872 = vpack.c.b16 %v2530, %v2528
    %v2873 = vpack.c.b16 %v2531, %v2529
    %v2874 = vpack.c.b16 %v2534, %v2532
    %v2875 = vpack.c.b16 %v2535, %v2533
    %v2876 = vpack.c.b16 %v2538, %v2536
    %v2877 = vpack.c.b16 %v2539, %v2537
    %v2878 = vpack.c.b16 %v2542, %v2540
    %v2879 = vpack.c.b16 %v2543, %v2541
    %v2880 = vpack.c.b16 %v2546, %v2544
    %v2881 = vpack.c.b16 %v2547, %v2545
    %v2882 = vpack.c.b16 %v2550, %v2548
    %v2883 = vpack.c.b16 %v2551, %v2549
    %v2884 = vpack.c.b16 %v2554, %v2552
    %v2885 = vpack.c.b16 %v2555, %v2553
    %v2886 = vpack.c.b16 %v2558, %v2556
    %v2887 = vpack.c.b16 %v2559, %v2557
    %v2888 = vpack.c.b16 %v2562, %v2560
    %v2889 = vpack.c.b16 %v2563, %v2561
    %v2890 = vpack.c.b16 %v2566, %v2564
    %v2891 = vpack.c.b16 %v2567, %v2565
    %v2892 = vpack.c.b16 %v2570, %v2568
    %v2893 = vpack.c.b16 %v2571, %v2569
    %v2894 = vpack.c.b16 %v2574, %v2572
    %v2895 = vpack.c.b16 %v2575, %v2573
    %v2896 = vpack.c.b16 %v2578, %v2576
    %v2897 = vpack.c.b16 %v2579, %v2577
    %v2898 = vpack.c.b16 %v2582, %v2580
    %v2899 = vpack.c.b16 %v2583, %v2581
    %v2900 = vpack.c.b16 %v2586, %v2584
    %v2901 = vpack.c.b16 %v2587, %v2585
    %v2902 = vpack.c.b16 %v2590, %v2588
    %v2903 = vpack.c.b16 %v2591, %v2589
    %v2904 = vpack.c.b16 %v2594, %v2592
    %v2905 = vpack.c.b16 %v2595, %v2593
    %v2906 = vpack.c.b16 %v2598, %v2596
    %v2907 = vpack.c.b16 %v2599, %v2597
    %v2908 = vpack.c.b16 %v2602, %v2600
    %v2909 = vpack.c.b16 %v2603, %v2601
    %v2910 = vpack.c.b16 %v2606, %v2604
    %v2911 = vpack.c.b16 %v2607, %v2605
    %v2912 = vpack.c.b16 %v2610, %v2608
    %v2913 = vpack.c.b16 %v2611, %v2609
    %v2914 = vpack.c.b16 %v2614, %v2612
    %v2915 = vpack.c.b16 %v2615, %v2613
    %v2916 = vpack.c.b16 %v2618, %v2616
    %v2917 = vpack.c.b16 %v2619, %v2617
    %v2918 = vpack.c.b16 %v2622, %v2620
    %v2919 = vpack.c.b16 %v2623, %v2621
    %v2920 = vpack.c.b16 %v2626, %v2624
    %v2921 = vpack.c.b16 %v2627, %v2625
    %v2922 = vpack.c.b16 %v2630, %v2628
    %v2923 = vpack.c.b16 %v2631, %v2629
    %v2924 = vpack.c.b16 %v2634, %v2632
    %v2925 = vpack.c.b16 %v2635, %v2633
    %v2926 = vpack.c.b16 %v2638, %v2636
    %v2927 = vpack.c.b16 %v2639, %v2637
    %v2928 = vpack.c.b16 %v2642, %v2640
    %v2929 = vpack.c.b16 %v2643, %v2641
    %v2930 = vpack.c.b16 %v2646, %v2644
    %v2931 = vpack.c.b16 %v2647, %v2645
    %v2932 = vpack.c.b16 %v2650, %v2648
    %v2933 = vpack.c.b16 %v2651, %v2649
    %v2934 = vpack.c.b16 %v2654, %v2652
    %v2935 = vpack.c.b16 %v2655, %v2653
    %v2936 = vpack.c.b16 %v2658, %v2656
    %v2937 = vpack.c.b16 %v2659, %v2657
    %v2938 = vpack.c.b16 %v2662, %v2660
    %v2939 = vpack.c.b16 %v2663, %v2661
    %v2940 = vpack.c.b16 %v2666, %v2664
    %v2941 = vpack.c.b16 %v2667, %v2665
    %v2942 = vpack.c.b16 %v2670, %v2668
    %v2943 = vpack.c.b16 %v2671, %v2669
    %v2944 = vpack.c.b16 %v2674, %v2672
    %v2945 = vpack.c.b16 %v2675, %v2673
    %v2946 = vpack.c.b16 %v2678, %v2676
    %v2947 = vpack.c.b16 %v2679, %v2677
    %v2948 = vpack.c.b16 %v2682, %v2680
    %v2949 = vpack.c.b16 %v2683, %v2681
    %v2950 = vpack.c.b16 %v2686, %v2684
    %v2951 = vpack.c.b16 %v2687, %v2685
    %v2952 = vpack.c.b16 %v2690, %v2688
    %v2953 = vpack.c.b16 %v2691, %v2689
    %v2954 = vpack.c.b16 %v2694, %v2692
    %v2955 = vpack.c.b16 %v2695, %v2693
    %v2956 = vpack.c.b16 %v2698, %v2696
    %v2957 = vpack.c.b16 %v2699, %v2697
    %v2958 = vpack.c.b16 %v2702, %v2700
    %v2959 = vpack.c.b16 %v2703, %v2701
    %3216 = vmatpush.bf16.msra.mxu0 %v2718
    %3217 = vmatpush.bf16.msra.mxu0 %v2716
    %3218 = vmatpush.bf16.msra.mxu0 %v2714
    %3219 = vmatpush.bf16.msra.mxu0 %v2712
    %3220 = vmatpush.bf16.msra.mxu0 %v2710
    %3221 = vmatpush.bf16.msra.mxu0 %v2708
    %3222 = vmatpush.bf16.msra.mxu0 %v2706
    %3223 = vmatpush.bf16.msra.mxu0 %v2704
    %3224 = vmatmul.bf16.gmra.mxu0 %v1664
    %v3225 = vpop.f32.mrf.mxu0
    %v3226 = vadd.f32 %v22, %v3225
    %v3227 = vpop.f32.mrf.mxu0
    %v3228 = vadd.f32 %v24, %v3227
    %3229 = vdwg.mxu0
    %3230 = vmatpush.bf16.msra.mxu0 %v2734
    %3231 = vmatpush.bf16.msra.mxu0 %v2732
    %3232 = vmatpush.bf16.msra.mxu0 %v2730
    %3233 = vmatpush.bf16.msra.mxu0 %v2728
    %3234 = vmatpush.bf16.msra.mxu0 %v2726
    %3235 = vmatpush.bf16.msra.mxu0 %v2724
    %3236 = vmatpush.bf16.msra.mxu0 %v2722
    %3237 = vmatpush.bf16.msra.mxu0 %v2720
    %3238 = vmatmul.bf16.gmra.mxu0 %v1665
    %v3239 = vpop.f32.mrf.mxu0
    %v3240 = vadd.f32 %v3226, %v3239
    %v3241 = vpop.f32.mrf.mxu0
    %v3242 = vadd.f32 %v3228, %v3241
    %3243 = vdwg.mxu0
    %3244 = vmatpush.bf16.msra.mxu0 %v2750
    %3245 = vmatpush.bf16.msra.mxu0 %v2748
    %3246 = vmatpush.bf16.msra.mxu0 %v2746
    %3247 = vmatpush.bf16.msra.mxu0 %v2744
    %3248 = vmatpush.bf16.msra.mxu0 %v2742
    %3249 = vmatpush.bf16.msra.mxu0 %v2740
    %3250 = vmatpush.bf16.msra.mxu0 %v2738
    %3251 = vmatpush.bf16.msra.mxu0 %v2736
    %3252 = vmatmul.bf16.gmra.mxu0 %v1666
    %v3253 = vpop.f32.mrf.mxu0
    %v3254 = vadd.f32 %v3240, %v3253
    %v3255 = vpop.f32.mrf.mxu0
    %v3256 = vadd.f32 %v3242, %v3255
    %3257 = vdwg.mxu0
    %3258 = vmatpush.bf16.msra.mxu0 %v2766
    %3259 = vmatpush.bf16.msra.mxu0 %v2764
    %3260 = vmatpush.bf16.msra.mxu0 %v2762
    %3261 = vmatpush.bf16.msra.mxu0 %v2760
    %3262 = vmatpush.bf16.msra.mxu0 %v2758
    %3263 = vmatpush.bf16.msra.mxu0 %v2756
    %3264 = vmatpush.bf16.msra.mxu0 %v2754
    %3265 = vmatpush.bf16.msra.mxu0 %v2752
    %3266 = vmatmul.bf16.gmra.mxu0 %v1667
    %v3267 = vpop.f32.mrf.mxu0
    %v3268 = vadd.f32 %v3254, %v3267
    %v3269 = vpop.f32.mrf.mxu0
    %v3270 = vadd.f32 %v3256, %v3269
    %3271 = vdwg.mxu0
    %3272 = vmatpush.bf16.msra.mxu0 %v2782
    %3273 = vmatpush.bf16.msra.mxu0 %v2780
    %3274 = vmatpush.bf16.msra.mxu0 %v2778
    %3275 = vmatpush.bf16.msra.mxu0 %v2776
    %3276 = vmatpush.bf16.msra.mxu0 %v2774
    %3277 = vmatpush.bf16.msra.mxu0 %v2772
    %3278 = vmatpush.bf16.msra.mxu0 %v2770
    %3279 = vmatpush.bf16.msra.mxu0 %v2768
    %3280 = vmatmul.bf16.gmra.mxu0 %v1668
    %v3281 = vpop.f32.mrf.mxu0
    %v3282 = vadd.f32 %v3268, %v3281
    %v3283 = vpop.f32.mrf.mxu0
    %v3284 = vadd.f32 %v3270, %v3283
    %3285 = vdwg.mxu0
    %3286 = vmatpush.bf16.msra.mxu0 %v2798
    %3287 = vmatpush.bf16.msra.mxu0 %v2796
    %3288 = vmatpush.bf16.msra.mxu0 %v2794
    %3289 = vmatpush.bf16.msra.mxu0 %v2792
    %3290 = vmatpush.bf16.msra.mxu0 %v2790
    %3291 = vmatpush.bf16.msra.mxu0 %v2788
    %3292 = vmatpush.bf16.msra.mxu0 %v2786
    %3293 = vmatpush.bf16.msra.mxu0 %v2784
    %3294 = vmatmul.bf16.gmra.mxu0 %v1669
    %v3295 = vpop.f32.mrf.mxu0
    %v3296 = vadd.f32 %v3282, %v3295
    %v3297 = vpop.f32.mrf.mxu0
    %v3298 = vadd.f32 %v3284, %v3297
    %3299 = vdwg.mxu0
    %3300 = vmatpush.bf16.msra.mxu0 %v2814
    %3301 = vmatpush.bf16.msra.mxu0 %v2812
    %3302 = vmatpush.bf16.msra.mxu0 %v2810
    %3303 = vmatpush.bf16.msra.mxu0 %v2808
    %3304 = vmatpush.bf16.msra.mxu0 %v2806
    %3305 = vmatpush.bf16.msra.mxu0 %v2804
    %3306 = vmatpush.bf16.msra.mxu0 %v2802
    %3307 = vmatpush.bf16.msra.mxu0 %v2800
    %3308 = vmatmul.bf16.gmra.mxu0 %v1670
    %v3309 = vpop.f32.mrf.mxu0
    %v3310 = vadd.f32 %v3296, %v3309
    %v3311 = vpop.f32.mrf.mxu0
    %v3312 = vadd.f32 %v3298, %v3311
    %3313 = vdwg.mxu0
    %3314 = vmatpush.bf16.msra.mxu0 %v2830
    %3315 = vmatpush.bf16.msra.mxu0 %v2828
    %3316 = vmatpush.bf16.msra.mxu0 %v2826
    %3317 = vmatpush.bf16.msra.mxu0 %v2824
    %3318 = vmatpush.bf16.msra.mxu0 %v2822
    %3319 = vmatpush.bf16.msra.mxu0 %v2820
    %3320 = vmatpush.bf16.msra.mxu0 %v2818
    %3321 = vmatpush.bf16.msra.mxu0 %v2816
    %3322 = vmatmul.bf16.gmra.mxu0 %v1671
    %v3323 = vpop.f32.mrf.mxu0
    %v3324 = vadd.f32 %v3310, %v3323
    %v3325 = vpop.f32.mrf.mxu0
    %v3326 = vadd.f32 %v3312, %v3325
    %3327 = vdwg.mxu0
    %3328 = vmatpush.bf16.msra.mxu0 %v2846
    %3329 = vmatpush.bf16.msra.mxu0 %v2844
    %3330 = vmatpush.bf16.msra.mxu0 %v2842
    %3331 = vmatpush.bf16.msra.mxu0 %v2840
    %3332 = vmatpush.bf16.msra.mxu0 %v2838
    %3333 = vmatpush.bf16.msra.mxu0 %v2836
    %3334 = vmatpush.bf16.msra.mxu0 %v2834
    %3335 = vmatpush.bf16.msra.mxu0 %v2832
    %3336 = vmatmul.bf16.gmra.mxu0 %v1672
    %v3337 = vpop.f32.mrf.mxu0
    %v3338 = vadd.f32 %v3324, %v3337
    %v3339 = vpop.f32.mrf.mxu0
    %v3340 = vadd.f32 %v3326, %v3339
    %3341 = vdwg.mxu0
    %3342 = vmatpush.bf16.msra.mxu0 %v2862
    %3343 = vmatpush.bf16.msra.mxu0 %v2860
    %3344 = vmatpush.bf16.msra.mxu0 %v2858
    %3345 = vmatpush.bf16.msra.mxu0 %v2856
    %3346 = vmatpush.bf16.msra.mxu0 %v2854
    %3347 = vmatpush.bf16.msra.mxu0 %v2852
    %3348 = vmatpush.bf16.msra.mxu0 %v2850
    %3349 = vmatpush.bf16.msra.mxu0 %v2848
    %3350 = vmatmul.bf16.gmra.mxu0 %v1673
    %v3351 = vpop.f32.mrf.mxu0
    %v3352 = vadd.f32 %v3338, %v3351
    %v3353 = vpop.f32.mrf.mxu0
    %v3354 = vadd.f32 %v3340, %v3353
    %3355 = vdwg.mxu0
    %3356 = vmatpush.bf16.msra.mxu0 %v2878
    %3357 = vmatpush.bf16.msra.mxu0 %v2876
    %3358 = vmatpush.bf16.msra.mxu0 %v2874
    %3359 = vmatpush.bf16.msra.mxu0 %v2872
    %3360 = vmatpush.bf16.msra.mxu0 %v2870
    %3361 = vmatpush.bf16.msra.mxu0 %v2868
    %3362 = vmatpush.bf16.msra.mxu0 %v2866
    %3363 = vmatpush.bf16.msra.mxu0 %v2864
    %3364 = vmatmul.bf16.gmra.mxu0 %v1674
    %v3365 = vpop.f32.mrf.mxu0
    %v3366 = vadd.f32 %v3352, %v3365
    %v3367 = vpop.f32.mrf.mxu0
    %v3368 = vadd.f32 %v3354, %v3367
    %3369 = vdwg.mxu0
    %3370 = vmatpush.bf16.msra.mxu0 %v2894
    %3371 = vmatpush.bf16.msra.mxu0 %v2892
    %3372 = vmatpush.bf16.msra.mxu0 %v2890
    %3373 = vmatpush.bf16.msra.mxu0 %v2888
    %3374 = vmatpush.bf16.msra.mxu0 %v2886
    %3375 = vmatpush.bf16.msra.mxu0 %v2884
    %3376 = vmatpush.bf16.msra.mxu0 %v2882
    %3377 = vmatpush.bf16.msra.mxu0 %v2880
    %3378 = vmatmul.bf16.gmra.mxu0 %v1675
    %v3379 = vpop.f32.mrf.mxu0
    %v3380 = vadd.f32 %v3366, %v3379
    %v3381 = vpop.f32.mrf.mxu0
    %v3382 = vadd.f32 %v3368, %v3381
    %3383 = vdwg.mxu0
    %3384 = vmatpush.bf16.msra.mxu0 %v2910
    %3385 = vmatpush.bf16.msra.mxu0 %v2908
    %3386 = vmatpush.bf16.msra.mxu0 %v2906
    %3387 = vmatpush.bf16.msra.mxu0 %v2904
    %3388 = vmatpush.bf16.msra.mxu0 %v2902
    %3389 = vmatpush.bf16.msra.mxu0 %v2900
    %3390 = vmatpush.bf16.msra.mxu0 %v2898
    %3391 = vmatpush.bf16.msra.mxu0 %v2896
    %3392 = vmatmul.bf16.gmra.mxu0 %v1676
    %v3393 = vpop.f32.mrf.mxu0
    %v3394 = vadd.f32 %v3380, %v3393
    %v3395 = vpop.f32.mrf.mxu0
    %v3396 = vadd.f32 %v3382, %v3395
    %3397 = vdwg.mxu0
    %3398 = vmatpush.bf16.msra.mxu0 %v2926
    %3399 = vmatpush.bf16.msra.mxu0 %v2924
    %3400 = vmatpush.bf16.msra.mxu0 %v2922
    %3401 = vmatpush.bf16.msra.mxu0 %v2920
    %3402 = vmatpush.bf16.msra.mxu0 %v2918
    %3403 = vmatpush.bf16.msra.mxu0 %v2916
    %3404 = vmatpush.bf16.msra.mxu0 %v2914
    %3405 = vmatpush.bf16.msra.mxu0 %v2912
    %3406 = vmatmul.bf16.gmra.mxu0 %v1677
    %v3407 = vpop.f32.mrf.mxu0
    %v3408 = vadd.f32 %v3394, %v3407
    %v3409 = vpop.f32.mrf.mxu0
    %v3410 = vadd.f32 %v3396, %v3409
    %3411 = vdwg.mxu0
    %3412 = vmatpush.bf16.msra.mxu0 %v2942
    %3413 = vmatpush.bf16.msra.mxu0 %v2940
    %3414 = vmatpush.bf16.msra.mxu0 %v2938
    %3415 = vmatpush.bf16.msra.mxu0 %v2936
    %3416 = vmatpush.bf16.msra.mxu0 %v2934
    %3417 = vmatpush.bf16.msra.mxu0 %v2932
    %3418 = vmatpush.bf16.msra.mxu0 %v2930
    %3419 = vmatpush.bf16.msra.mxu0 %v2928
    %3420 = vmatmul.bf16.gmra.mxu0 %v1678
    %v3421 = vpop.f32.mrf.mxu0
    %v3422 = vadd.f32 %v3408, %v3421
    %v3423 = vpop.f32.mrf.mxu0
    %v3424 = vadd.f32 %v3410, %v3423
    %3425 = vdwg.mxu0
    %3426 = vmatpush.bf16.msra.mxu0 %v2958
    %3427 = vmatpush.bf16.msra.mxu0 %v2956
    %3428 = vmatpush.bf16.msra.mxu0 %v2954
    %3429 = vmatpush.bf16.msra.mxu0 %v2952
    %3430 = vmatpush.bf16.msra.mxu0 %v2950
    %3431 = vmatpush.bf16.msra.mxu0 %v2948
    %3432 = vmatpush.bf16.msra.mxu0 %v2946
    %3433 = vmatpush.bf16.msra.mxu0 %v2944
    %3434 = vmatmul.bf16.gmra.mxu0 %v1679
    %v3435 = vpop.f32.mrf.mxu0
    %v3436 = vadd.f32 %v3422, %v3435
    %v3437 = vpop.f32.mrf.mxu0
    %v3438 = vadd.f32 %v3424, %v3437
    %3439 = vdwg.mxu0
    %3440 = vmatpush.bf16.msra.mxu0 %v2719
    %3441 = vmatpush.bf16.msra.mxu0 %v2717
    %3442 = vmatpush.bf16.msra.mxu0 %v2715
    %3443 = vmatpush.bf16.msra.mxu0 %v2713
    %3444 = vmatpush.bf16.msra.mxu0 %v2711
    %3445 = vmatpush.bf16.msra.mxu0 %v2709
    %3446 = vmatpush.bf16.msra.mxu0 %v2707
    %3447 = vmatpush.bf16.msra.mxu0 %v2705
    %3448 = vmatmul.bf16.gmra.mxu0 %v1664
    %v3449 = vpop.f32.mrf.mxu0
    %v3450 = vadd.f32 %v23, %v3449
    %v3451 = vpop.f32.mrf.mxu0
    %v3452 = vadd.f32 %v25, %v3451
    %3453 = vdwg.mxu0
    %3454 = vmatpush.bf16.msra.mxu0 %v2735
    %3455 = vmatpush.bf16.msra.mxu0 %v2733
    %3456 = vmatpush.bf16.msra.mxu0 %v2731
    %3457 = vmatpush.bf16.msra.mxu0 %v2729
    %3458 = vmatpush.bf16.msra.mxu0 %v2727
    %3459 = vmatpush.bf16.msra.mxu0 %v2725
    %3460 = vmatpush.bf16.msra.mxu0 %v2723
    %3461 = vmatpush.bf16.msra.mxu0 %v2721
    %3462 = vmatmul.bf16.gmra.mxu0 %v1665
    %v3463 = vpop.f32.mrf.mxu0
    %v3464 = vadd.f32 %v3450, %v3463
    %v3465 = vpop.f32.mrf.mxu0
    %v3466 = vadd.f32 %v3452, %v3465
    %3467 = vdwg.mxu0
    %3468 = vmatpush.bf16.msra.mxu0 %v2751
    %3469 = vmatpush.bf16.msra.mxu0 %v2749
    %3470 = vmatpush.bf16.msra.mxu0 %v2747
    %3471 = vmatpush.bf16.msra.mxu0 %v2745
    %3472 = vmatpush.bf16.msra.mxu0 %v2743
    %3473 = vmatpush.bf16.msra.mxu0 %v2741
    %3474 = vmatpush.bf16.msra.mxu0 %v2739
    %3475 = vmatpush.bf16.msra.mxu0 %v2737
    %3476 = vmatmul.bf16.gmra.mxu0 %v1666
    %v3477 = vpop.f32.mrf.mxu0
    %v3478 = vadd.f32 %v3464, %v3477
    %v3479 = vpop.f32.mrf.mxu0
    %v3480 = vadd.f32 %v3466, %v3479
    %3481 = vdwg.mxu0
    %3482 = vmatpush.bf16.msra.mxu0 %v2767
    %3483 = vmatpush.bf16.msra.mxu0 %v2765
    %3484 = vmatpush.bf16.msra.mxu0 %v2763
    %3485 = vmatpush.bf16.msra.mxu0 %v2761
    %3486 = vmatpush.bf16.msra.mxu0 %v2759
    %3487 = vmatpush.bf16.msra.mxu0 %v2757
    %3488 = vmatpush.bf16.msra.mxu0 %v2755
    %3489 = vmatpush.bf16.msra.mxu0 %v2753
    %3490 = vmatmul.bf16.gmra.mxu0 %v1667
    %v3491 = vpop.f32.mrf.mxu0
    %v3492 = vadd.f32 %v3478, %v3491
    %v3493 = vpop.f32.mrf.mxu0
    %v3494 = vadd.f32 %v3480, %v3493
    %3495 = vdwg.mxu0
    %3496 = vmatpush.bf16.msra.mxu0 %v2783
    %3497 = vmatpush.bf16.msra.mxu0 %v2781
    %3498 = vmatpush.bf16.msra.mxu0 %v2779
    %3499 = vmatpush.bf16.msra.mxu0 %v2777
    %3500 = vmatpush.bf16.msra.mxu0 %v2775
    %3501 = vmatpush.bf16.msra.mxu0 %v2773
    %3502 = vmatpush.bf16.msra.mxu0 %v2771
    %3503 = vmatpush.bf16.msra.mxu0 %v2769
    %3504 = vmatmul.bf16.gmra.mxu0 %v1668
    %v3505 = vpop.f32.mrf.mxu0
    %v3506 = vadd.f32 %v3492, %v3505
    %v3507 = vpop.f32.mrf.mxu0
    %v3508 = vadd.f32 %v3494, %v3507
    %3509 = vdwg.mxu0
    %3510 = vmatpush.bf16.msra.mxu0 %v2799
    %3511 = vmatpush.bf16.msra.mxu0 %v2797
    %3512 = vmatpush.bf16.msra.mxu0 %v2795
    %3513 = vmatpush.bf16.msra.mxu0 %v2793
    %3514 = vmatpush.bf16.msra.mxu0 %v2791
    %3515 = vmatpush.bf16.msra.mxu0 %v2789
    %3516 = vmatpush.bf16.msra.mxu0 %v2787
    %3517 = vmatpush.bf16.msra.mxu0 %v2785
    %3518 = vmatmul.bf16.gmra.mxu0 %v1669
    %v3519 = vpop.f32.mrf.mxu0
    %v3520 = vadd.f32 %v3506, %v3519
    %v3521 = vpop.f32.mrf.mxu0
    %v3522 = vadd.f32 %v3508, %v3521
    %3523 = vdwg.mxu0
    %3524 = vmatpush.bf16.msra.mxu0 %v2815
    %3525 = vmatpush.bf16.msra.mxu0 %v2813
    %3526 = vmatpush.bf16.msra.mxu0 %v2811
    %3527 = vmatpush.bf16.msra.mxu0 %v2809
    %3528 = vmatpush.bf16.msra.mxu0 %v2807
    %3529 = vmatpush.bf16.msra.mxu0 %v2805
    %3530 = vmatpush.bf16.msra.mxu0 %v2803
    %3531 = vmatpush.bf16.msra.mxu0 %v2801
    %3532 = vmatmul.bf16.gmra.mxu0 %v1670
    %v3533 = vpop.f32.mrf.mxu0
    %v3534 = vadd.f32 %v3520, %v3533
    %v3535 = vpop.f32.mrf.mxu0
    %v3536 = vadd.f32 %v3522, %v3535
    %3537 = vdwg.mxu0
    %3538 = vmatpush.bf16.msra.mxu0 %v2831
    %3539 = vmatpush.bf16.msra.mxu0 %v2829
    %3540 = vmatpush.bf16.msra.mxu0 %v2827
    %3541 = vmatpush.bf16.msra.mxu0 %v2825
    %3542 = vmatpush.bf16.msra.mxu0 %v2823
    %3543 = vmatpush.bf16.msra.mxu0 %v2821
    %3544 = vmatpush.bf16.msra.mxu0 %v2819
    %3545 = vmatpush.bf16.msra.mxu0 %v2817
    %3546 = vmatmul.bf16.gmra.mxu0 %v1671
    %v3547 = vpop.f32.mrf.mxu0
    %v3548 = vadd.f32 %v3534, %v3547
    %v3549 = vpop.f32.mrf.mxu0
    %v3550 = vadd.f32 %v3536, %v3549
    %3551 = vdwg.mxu0
    %3552 = vmatpush.bf16.msra.mxu0 %v2847
    %3553 = vmatpush.bf16.msra.mxu0 %v2845
    %3554 = vmatpush.bf16.msra.mxu0 %v2843
    %3555 = vmatpush.bf16.msra.mxu0 %v2841
    %3556 = vmatpush.bf16.msra.mxu0 %v2839
    %3557 = vmatpush.bf16.msra.mxu0 %v2837
    %3558 = vmatpush.bf16.msra.mxu0 %v2835
    %3559 = vmatpush.bf16.msra.mxu0 %v2833
    %3560 = vmatmul.bf16.gmra.mxu0 %v1672
    %v3561 = vpop.f32.mrf.mxu0
    %v3562 = vadd.f32 %v3548, %v3561
    %v3563 = vpop.f32.mrf.mxu0
    %v3564 = vadd.f32 %v3550, %v3563
    %3565 = vdwg.mxu0
    %3566 = vmatpush.bf16.msra.mxu0 %v2863
    %3567 = vmatpush.bf16.msra.mxu0 %v2861
    %3568 = vmatpush.bf16.msra.mxu0 %v2859
    %3569 = vmatpush.bf16.msra.mxu0 %v2857
    %3570 = vmatpush.bf16.msra.mxu0 %v2855
    %3571 = vmatpush.bf16.msra.mxu0 %v2853
    %3572 = vmatpush.bf16.msra.mxu0 %v2851
    %3573 = vmatpush.bf16.msra.mxu0 %v2849
    %3574 = vmatmul.bf16.gmra.mxu0 %v1673
    %v3575 = vpop.f32.mrf.mxu0
    %v3576 = vadd.f32 %v3562, %v3575
    %v3577 = vpop.f32.mrf.mxu0
    %v3578 = vadd.f32 %v3564, %v3577
    %3579 = vdwg.mxu0
    %3580 = vmatpush.bf16.msra.mxu0 %v2879
    %3581 = vmatpush.bf16.msra.mxu0 %v2877
    %3582 = vmatpush.bf16.msra.mxu0 %v2875
    %3583 = vmatpush.bf16.msra.mxu0 %v2873
    %3584 = vmatpush.bf16.msra.mxu0 %v2871
    %3585 = vmatpush.bf16.msra.mxu0 %v2869
    %3586 = vmatpush.bf16.msra.mxu0 %v2867
    %3587 = vmatpush.bf16.msra.mxu0 %v2865
    %3588 = vmatmul.bf16.gmra.mxu0 %v1674
    %v3589 = vpop.f32.mrf.mxu0
    %v3590 = vadd.f32 %v3576, %v3589
    %v3591 = vpop.f32.mrf.mxu0
    %v3592 = vadd.f32 %v3578, %v3591
    %3593 = vdwg.mxu0
    %3594 = vmatpush.bf16.msra.mxu0 %v2895
    %3595 = vmatpush.bf16.msra.mxu0 %v2893
    %3596 = vmatpush.bf16.msra.mxu0 %v2891
    %3597 = vmatpush.bf16.msra.mxu0 %v2889
    %3598 = vmatpush.bf16.msra.mxu0 %v2887
    %3599 = vmatpush.bf16.msra.mxu0 %v2885
    %3600 = vmatpush.bf16.msra.mxu0 %v2883
    %3601 = vmatpush.bf16.msra.mxu0 %v2881
    %3602 = vmatmul.bf16.gmra.mxu0 %v1675
    %v3603 = vpop.f32.mrf.mxu0
    %v3604 = vadd.f32 %v3590, %v3603
    %v3605 = vpop.f32.mrf.mxu0
    %v3606 = vadd.f32 %v3592, %v3605
    %3607 = vdwg.mxu0
    %3608 = vmatpush.bf16.msra.mxu0 %v2911
    %3609 = vmatpush.bf16.msra.mxu0 %v2909
    %3610 = vmatpush.bf16.msra.mxu0 %v2907
    %3611 = vmatpush.bf16.msra.mxu0 %v2905
    %3612 = vmatpush.bf16.msra.mxu0 %v2903
    %3613 = vmatpush.bf16.msra.mxu0 %v2901
    %3614 = vmatpush.bf16.msra.mxu0 %v2899
    %3615 = vmatpush.bf16.msra.mxu0 %v2897
    %3616 = vmatmul.bf16.gmra.mxu0 %v1676
    %v3617 = vpop.f32.mrf.mxu0
    %v3618 = vadd.f32 %v3604, %v3617
    %v3619 = vpop.f32.mrf.mxu0
    %v3620 = vadd.f32 %v3606, %v3619
    %3621 = vdwg.mxu0
    %3622 = vmatpush.bf16.msra.mxu0 %v2927
    %3623 = vmatpush.bf16.msra.mxu0 %v2925
    %3624 = vmatpush.bf16.msra.mxu0 %v2923
    %3625 = vmatpush.bf16.msra.mxu0 %v2921
    %3626 = vmatpush.bf16.msra.mxu0 %v2919
    %3627 = vmatpush.bf16.msra.mxu0 %v2917
    %3628 = vmatpush.bf16.msra.mxu0 %v2915
    %3629 = vmatpush.bf16.msra.mxu0 %v2913
    %3630 = vmatmul.bf16.gmra.mxu0 %v1677
    %v3631 = vpop.f32.mrf.mxu0
    %v3632 = vadd.f32 %v3618, %v3631
    %v3633 = vpop.f32.mrf.mxu0
    %v3634 = vadd.f32 %v3620, %v3633
    %3635 = vdwg.mxu0
    %3636 = vmatpush.bf16.msra.mxu0 %v2943
    %3637 = vmatpush.bf16.msra.mxu0 %v2941
    %3638 = vmatpush.bf16.msra.mxu0 %v2939
    %3639 = vmatpush.bf16.msra.mxu0 %v2937
    %3640 = vmatpush.bf16.msra.mxu0 %v2935
    %3641 = vmatpush.bf16.msra.mxu0 %v2933
    %3642 = vmatpush.bf16.msra.mxu0 %v2931
    %3643 = vmatpush.bf16.msra.mxu0 %v2929
    %3644 = vmatmul.bf16.gmra.mxu0 %v1678
    %v3645 = vpop.f32.mrf.mxu0
    %v3646 = vadd.f32 %v3632, %v3645
    %v3647 = vpop.f32.mrf.mxu0
    %v3648 = vadd.f32 %v3634, %v3647
    %3649 = vdwg.mxu0
    %3650 = vmatpush.bf16.msra.mxu0 %v2959
    %3651 = vmatpush.bf16.msra.mxu0 %v2957
    %3652 = vmatpush.bf16.msra.mxu0 %v2955
    %3653 = vmatpush.bf16.msra.mxu0 %v2953
    %3654 = vmatpush.bf16.msra.mxu0 %v2951
    %3655 = vmatpush.bf16.msra.mxu0 %v2949
    %3656 = vmatpush.bf16.msra.mxu0 %v2947
    %3657 = vmatpush.bf16.msra.mxu0 %v2945
    %3658 = vmatmul.bf16.gmra.mxu0 %v1679
    %v3659 = vpop.f32.mrf.mxu0
    %v3660 = vadd.f32 %v3646, %v3659
    %v3661 = vpop.f32.mrf.mxu0
    %v3662 = vadd.f32 %v3648, %v3661
    %3663 = vdwg.mxu0
    %v3664 = vsel %vm1180, %v3660, 0.0
    %v3665 = vadd.f32 %v3436, %v3664
    %3666 = vadd.xlane.f32.xlu0 %v3665
    %v3667 = vpop.xlane.xlu0 %3666
    %v3668 = vsel %vm1180, %v3662, 0.0
    %v3669 = vadd.f32 %v3438, %v3668
    %3670 = vadd.xlane.f32.xlu0 %v3669
    %v3671 = vpop.xlane.xlu0 %3670
    %v3672 = vrcp.pop 192.0
    %v3673 = vmul.f32 192.0, %v3672
    %v3674 = vsub.f32 1.0, %v3673
    %v3675 = vmul.f32 %v3672, %v3674
    %v3676 = vadd.f32 %v3672, %v3675
    %vm3677 = vweird.f32 %v3672
    %v3678 = vsel %vm3677, %v3672, %v3676
    %v3679 = vmul.f32 %v3667, %v3678
    %v3680 = vmul.f32 %v3671, %v3678
    %v3681 = vsub.f32 %v3436, %v3679
    %v3682 = vsub.f32 %v3660, %v3679
    %v3683 = vsub.f32 %v3438, %v3680
    %v3684 = vsub.f32 %v3662, %v3680
    %v3685 = vmul.f32 %v3681, %v3681
    %v3686 = vmul.f32 %v3682, %v3682
    %v3687 = vmul.f32 %v3683, %v3683
    %v3688 = vmul.f32 %v3684, %v3684
    %v3689 = vsel %vm1180, %v3686, 0.0
    %v3690 = vadd.f32 %v3685, %v3689
    %3691 = vadd.xlane.f32.xlu0 %v3690
    %v3692 = vpop.xlane.xlu0 %3691
    %v3693 = vsel %vm1180, %v3688, 0.0
    %v3694 = vadd.f32 %v3687, %v3693
    %3695 = vadd.xlane.f32.xlu0 %v3694
    %v3696 = vpop.xlane.xlu0 %3695
    %v3697 = vmul.f32 %v3692, %v3678
    %v3698 = vmul.f32 %v3696, %v3678
    %v3699 = vadd.f32 %v3697, 1e-05
    %v3700 = vadd.f32 %v3698, 1e-05
    %v3701 = vrsqrt.pop %v3699
    %v3702 = vmul.f32 %v3701, %v3699
    %v3703 = vmul.f32 %v3702, %v3701
    %v3704 = vmul.f32 0.5, %v3703
    %v3705 = vsub.f32 1.5, %v3704
    %v3706 = vmul.f32 %v3701, %v3705
    %vm3707 = vweird.f32 %v3699
    %vm3708 = vweird.f32 %v3701
    %vm3709 = vmor %vm3707, %vm3708
    %v3710 = vsel %vm3709, %v3701, %v3706
    %v3711 = vrsqrt.pop %v3700
    %v3712 = vmul.f32 %v3711, %v3700
    %v3713 = vmul.f32 %v3712, %v3711
    %v3714 = vmul.f32 0.5, %v3713
    %v3715 = vsub.f32 1.5, %v3714
    %v3716 = vmul.f32 %v3711, %v3715
    %vm3717 = vweird.f32 %v3700
    %vm3718 = vweird.f32 %v3711
    %vm3719 = vmor %vm3717, %vm3718
    %v3720 = vsel %vm3719, %v3711, %v3716
    %v3721 = vmul.f32 %v3681, %v3710
    %v3722 = vmul.f32 %v3682, %v3710
    %v3723 = vmul.f32 %v3683, %v3720
    %v3724 = vmul.f32 %v3684, %v3720
    %v3725 = vld [vmem:[%s3] sm:$0x3]
    %v3727 = vperm.slane %v3725, 0
    %v3728 = vperm.slane %v3725, 1
    %v3731 = vmul.f32 %v3721, %v3727
    %v3732 = vmul.f32 %v3722, %v3728
    %v3733 = vmul.f32 %v3723, %v3727
    %v3734 = vmul.f32 %v3724, %v3728
    %v3735 = vld [vmem:[%s4] sm:$0x3]
    %v3737 = vperm.slane %v3735, 0
    %v3738 = vperm.slane %v3735, 1
    %v3741 = vadd.f32 %v3731, %v3737
    %v3742 = vadd.f32 %v3732, %v3738
    %v3743 = vadd.f32 %v3733, %v3737
    %v3744 = vadd.f32 %v3734, %v3738
    %3745 = vst [vmem:[#allocation2] sm:$0xff] %v3741
    %3746 = vst.msk [vmem:[#allocation2 + $0x8] sm:$0xff] %vm1180, %v3742
    %3747 = vst [vmem:[#allocation2 + $0x10] sm:$0xff] %v3743
    %3748 = vst.msk [vmem:[#allocation2 + $0x18] sm:$0xff] %vm1180, %v3744
    // Predicated region
    $region22: #{poswise_ffn.1} parent=1 // pred_check
      _
    $region23: #{poswise_ffn.1} parent=1 // pred_check_branch
      %3750 = sbr.rel (0) target = $region25
    $region24: #{poswise_ffn.1} parent=1 // pred_region
      %3752 = vsyncadd [#allocation3], 0
      %s3753 = sshll.u32 [#allocation2], 4
      %s3754 = int_to_ptr.vmem [resolvable:$true] %s3753
      %s3755 = sshll.u32 %s5, 4
      %s3756 = int_to_ptr.hbm [resolvable:$true] %s3755
      %3761 = dma.vmem_to_hbm [thread:$0]  %s3754, 512, %s3756, [#allocation3], 256, 256, 16
    $region25: #{poswise_ffn.1} parent=1 // pred_fallthru
      _
    // Predicated region
    $region26: #{poswise_ffn.1} parent=1 // pred_check
      _
    $region27: #{poswise_ffn.1} parent=1 // pred_check_branch
      %3763 = sbr.rel (0) target = $region29
    $region28: #{poswise_ffn.1} parent=1 // pred_region
      %3765 = dma.done [#allocation3], 512
    $region29: #{poswise_ffn.1} parent=1 // pred_fallthru
      _
    %3766 = vsyncpa [#allocation3], 1

</llo_original>
